<compile_context>
chip_gen: v5e
topology: v5e:2x2
jax: 0.10.0
libtpu: 0.0.40
codegen_flags: <defaults>
</compile_context>

<pallas_src>
import jax
import jax.numpy as jnp
from jax import lax
from jax.experimental import pallas as pl
from jax.experimental.pallas import tpu as pltpu

VMEM = pltpu.MemorySpace.VMEM


def _roundup(x, m):
    return ((x + m - 1) // m) * m


def _cparams(nbytes, dims=None):
    # Generous headroom over the actual footprint, capped below v7x's 64 MiB
    # physical VMEM (v5e/v6e have 128 MiB, so the cap is safe everywhere).
    lim = int(min(max(2 * nbytes + (4 << 20), 32 << 20), 60 << 20))
    return pltpu.CompilerParams(dimension_semantics=dims, vmem_limit_bytes=lim)


def _row_tile(m):
    for t in (512, 256, 128, 64, 32, 16, 8):
        if m % t == 0 and m // t >= 2:
            return t
    return m


# ----------------------------------------------------------------------------
# Kernel 1: one full bidirectional GRU layer (input projection + recurrence).
#   seq_ref : [T*B, In]   bf16   (time-major rows, row = t*B + b)
#   wih_ref : [In, 3*GP]  bf16   (fused fwd+bwd input weights, padded gate slots)
#   bih_ref : [1, 3*GP]   f32
#   whh_ref : [GP, 3*GP]  bf16   (block-diagonal fwd/bwd recurrent weights)
#   bhh_ref : [1, 3*GP]   f32
#   mask_ref: [1, 3*GP]   f32    (1.0 on forward-direction lanes of each slot)
#   out_ref : [T, B, GP]  bf16   (lane-dense; fwd lanes 0:H, bwd lanes H:2H)
#   hN_ref  : [B, GP]     f32    (final hidden: fwd | bwd | zero padding)
# PyTorch gate order (r, z, n);  n = tanh(gi_n + r * gh_n).
# ----------------------------------------------------------------------------
def _gru_layer_kernel(seq_ref, wih_ref, bih_ref, whh_ref, bhh_ref, mask_ref,
                      out_ref, hN_ref, gx_scr):
    T, B, GP = out_ref.shape
    G3 = 3 * GP
    bf16 = jnp.bfloat16

    # (1) Fused fwd+bwd input projection: one MXU pass over all T*B rows.
    #     Bias folded in here; stored bf16 (halves the dominant scratch).
    gx_scr[...] = (jnp.dot(seq_ref[...], wih_ref[...],
                           preferred_element_type=jnp.float32)
                   + bih_ref[...]).astype(bf16)

    whh = whh_ref[...]                 # bf16 [GP, 3*GP]
    bhh = bhh_ref[...]                 # f32  [1, 3*GP]
    m = mask_ref[...]                  # f32  [1, 3*GP]
    one_minus_m = 1.0 - m              # hoisted out of the serial loop
    m_out = m[:, 0:GP]                 # [1, GP] fwd-lane mask (output swap)
    one_minus_m_out = 1.0 - m_out

    # TODO(synk): for very long T, stream gx in windows (grid over T with the
    # recurrence carried) and hold whh resident in the MXU via
    # pltpu.matmul_push_rhs / matmul_acc_lhs; also split B across TCs on v7x.
    def step(s, h):
        # Forward direction consumes time s, backward consumes time T-1-s.
        gxf = gx_scr[pl.ds(s * B, B), :].astype(jnp.float32)
        gxb = gx_scr[pl.ds((T - 1 - s) * B, B), :].astype(jnp.float32)
        gi = m * gxf + one_minus_m * gxb                      # [B, 3*GP]
        gh = jnp.dot(h.astype(bf16), whh,
                     preferred_element_type=jnp.float32) + bhh
        r = jax.nn.sigmoid(gi[:, 0:GP] + gh[:, 0:GP])         # 128-lane slices
        z = jax.nn.sigmoid(gi[:, GP:2 * GP] + gh[:, GP:2 * GP])
        n = jnp.tanh(gi[:, 2 * GP:3 * GP] + r * gh[:, 2 * GP:3 * GP])
        h_new = (1.0 - z) * n + z * h                         # [B, GP]
        out_ref[s] = h_new.astype(bf16)                       # one lane-dense store
        return h_new

    h_fin = lax.fori_loop(0, T, step, jnp.zeros((B, GP), jnp.float32),
                          unroll=min(8, T))
    hN_ref[...] = h_fin

    # (2) Epilogue: out[t] currently holds [fwd(t) | bwd(T-1-t) | 0]; swap the
    #     backward lanes between paired timesteps (t, T-1-t).  No concat, no
    #     second per-direction scratch buffer.  Middle element (odd T) is
    #     already correct.
    def fix(t, carry):
        a = out_ref[t].astype(jnp.float32)
        b = out_ref[T - 1 - t].astype(jnp.float32)
        out_ref[t] = (m_out * a + one_minus_m_out * b).astype(bf16)
        out_ref[T - 1 - t] = (m_out * b + one_minus_m_out * a).astype(bf16)
        return carry

    lax.fori_loop(0, T // 2, fix, 0, unroll=min(8, max(T // 2, 1)))


def gru_layer(seq2d, pw, fwd_mask, *, T, B, GP):
    G3 = 3 * GP
    nbytes = (seq2d.size * seq2d.dtype.itemsize
              + pw["wih_c"].size * 2 + pw["whh_c"].size * 2 + 2 * G3 * 4
              + T * B * G3 * 2          # gx scratch (bf16)
              + T * B * GP * 2          # output (bf16)
              + B * GP * 4)             # final hidden (f32)
    outs, hN = pl.pallas_call(
        _gru_layer_kernel,
        out_shape=[jax.ShapeDtypeStruct((T, B, GP), jnp.bfloat16),
                   jax.ShapeDtypeStruct((B, GP), jnp.float32)],
        in_specs=[pl.BlockSpec(memory_space=VMEM)] * 6,
        out_specs=[pl.BlockSpec(memory_space=VMEM)] * 2,
        scratch_shapes=[pltpu.VMEM((T * B, G3), jnp.bfloat16)],
        compiler_params=_cparams(nbytes),
    )(seq2d, pw["wih_c"], pw["bih_c"], pw["whh_c"], pw["bhh_c"], fwd_mask)
    return outs, hN


# ----------------------------------------------------------------------------
# Kernel 2: GatedGraphConv(hid_dim, num_layers=4).
# Message passing with dense adjacency (adj[dst, src] = #edges) on the MXU,
# GRUCell update with two fused gate matmuls (no lane-offset concatenate):
#   g = agg @ Wa + h @ Wh + bg   columns [r | z | gi_n | gh_n], 128-lane slots.
# ----------------------------------------------------------------------------
def _ggc_kernel(x_ref, adj_ref, wmsg_ref, wga_ref, wgh_ref, bg_ref, o_ref):
    h = x_ref[...]                                   # [N, HP] f32 (lanes >= H are 0)
    adj = adj_ref[...]                               # [N, N] bf16
    wga = wga_ref[...]                               # [HP, 4*HP] bf16
    wgh = wgh_ref[...]                               # [HP, 4*HP] bf16
    bg = bg_ref[...]                                 # [1, 4*HP]  f32
    HP = h.shape[1]
    for l in range(wmsg_ref.shape[0]):               # static unroll (4 steps)
        hb = h.astype(jnp.bfloat16)
        msg = jnp.dot(hb, wmsg_ref[l], preferred_element_type=jnp.float32)
        agg = jnp.dot(adj, msg.astype(jnp.bfloat16),
                      preferred_element_type=jnp.float32)
        g = (jnp.dot(agg.astype(jnp.bfloat16), wga,
                     preferred_element_type=jnp.float32)
             + jnp.dot(hb, wgh, preferred_element_type=jnp.float32) + bg)
        r = jax.nn.sigmoid(g[:, 0:HP])
        z = jax.nn.sigmoid(g[:, HP:2 * HP])
        n = jnp.tanh(g[:, 2 * HP:3 * HP] + r * g[:, 3 * HP:4 * HP])
        h = (1.0 - z) * n + z * h
    o_ref[...] = h


def gated_graph_conv(nodes, adj_bf16, p):
    N, HP = nodes.shape
    nbytes = (nodes.size * 4 + adj_bf16.size * 2 + p["w_msg"].size * 2
              + p["wg_a"].size * 2 + p["wg_h"].size * 2 + p["bg"].size * 4
              + N * HP * 4)
    return pl.pallas_call(
        _ggc_kernel,
        out_shape=jax.ShapeDtypeStruct((N, HP), jnp.float32),
        in_specs=[pl.BlockSpec(memory_space=VMEM)] * 6,
        out_specs=pl.BlockSpec(memory_space=VMEM),
        compiler_params=_cparams(nbytes),
    )(nodes, adj_bf16, p["w_msg"], p["wg_a"], p["wg_h"], p["bg"])


# ----------------------------------------------------------------------------
# Kernel 3: fused node-select + final projection, row-tiled grid (parallel).
#   selected = onehot(masked_map) @ nodes        (masked rows -> zero rows)
#   out      = rnn_rows @ W1 + selected @ W2 + b (concat folded into W split;
#              output padded to 128 lanes, stripped outside)
# TODO(synk): for large node counts replace the one-hot matmul gather with a
# scalar-prefetch (PrefetchScalarGridSpec + pl.Element) row gather.
# ----------------------------------------------------------------------------
def _cat_linear_kernel(a_ref, map_ref, nodes_ref, w1_ref, w2_ref, b_ref, o_ref):
    idx = map_ref[...]                                        # [tm, 1] i32 (-1 = masked)
    tm = idx.shape[0]
    N = nodes_ref.shape[0]
    lane = lax.broadcasted_iota(jnp.int32, (tm, N), 1)
    onehot = (lane == idx).astype(jnp.bfloat16)               # [tm, N]
    sel = jnp.dot(onehot, nodes_ref[...],
                  preferred_element_type=jnp.float32)         # [tm, HP]
    o_ref[...] = (jnp.dot(a_ref[...], w1_ref[...], preferred_element_type=jnp.float32)
                  + jnp.dot(sel.astype(jnp.bfloat16), w2_ref[...],
                            preferred_element_type=jnp.float32)
                  + b_ref[...])


def cat_linear(rnn_rows, nodes_bf16, masked_map, w1, w2, b):
    M, GP = rnn_rows.shape
    N, HP = nodes_bf16.shape
    NO = w1.shape[1]
    tm = _row_tile(M)
    nbytes = (2 * (tm * GP * 2 + tm * 4 + tm * NO * 4)   # double-buffered tiles
              + N * HP * 2 + w1.size * 2 + w2.size * 2 + NO * 4)
    return pl.pallas_call(
        _cat_linear_kernel,
        out_shape=jax.ShapeDtypeStruct((M, NO), jnp.float32),
        grid=(M // tm,),
        in_specs=[pl.BlockSpec((tm, GP), lambda i: (i, 0)),
                  pl.BlockSpec((tm, 1), lambda i: (i, 0)),
                  pl.BlockSpec((N, HP), lambda i: (0, 0)),
                  pl.BlockSpec((GP, NO), lambda i: (0, 0)),
                  pl.BlockSpec((HP, NO), lambda i: (0, 0)),
                  pl.BlockSpec((1, NO), lambda i: (0, 0))],
        out_specs=pl.BlockSpec((tm, NO), lambda i: (i, 0)),
        compiler_params=_cparams(nbytes, dims=("parallel",)),
    )(rnn_rows, masked_map, nodes_bf16, w1, w2, b)


# ----------------------------------------------------------------------------
# Parameter init (deterministic, PyTorch layout) + one-time packing.
# ----------------------------------------------------------------------------
def init_params(key, *, ref_size, node_size, num_features, hid_dim, n_layers,
                ggc_steps=4):
    F, H = num_features, hid_dim
    keys = iter(jax.random.split(key, 64))

    def nrm(shape, scale=0.1):
        return jax.random.normal(next(keys), shape, jnp.float32) * scale

    params = {
        "emb_ref": nrm((ref_size, F)).at[0].set(0.0),     # padding_idx=0
        "emb_node": nrm((node_size, F)).at[0].set(0.0),   # padding_idx=0
        "gru": [],
        "ggc_w": nrm((ggc_steps, H, H)),
        "ggc_wih": nrm((3 * H, H)),
        "ggc_whh": nrm((3 * H, H)),
        "ggc_bih": nrm((3 * H,)),
        "ggc_bhh": nrm((3 * H,)),
        "W_w": nrm((2 * H, 3 * H)),                        # Linear(3H -> 2H)
        "W_b": nrm((2 * H,)),
    }
    in_dim = F
    for _ in range(n_layers):
        dirs = []
        for _d in range(2):                                # forward / backward
            dirs.append({"w_ih": nrm((3 * H, in_dim)),
                         "w_hh": nrm((3 * H, H)),
                         "b_ih": nrm((3 * H,)),
                         "b_hh": nrm((3 * H,))})
        params["gru"].append(dirs)
        in_dim = 2 * H
    return params


def pack_params(params, *, num_features, hid_dim, n_layers):
    """Pre-transpose / fuse / pad weights once (not per forward)."""
    H = hid_dim
    D2 = 2 * H
    GP = _roundup(D2, 128)            # padded GRU gate slot (lane aligned)
    G3 = 3 * GP
    HP = _roundup(H, 128)             # padded GGC / node feature width
    NO = _roundup(D2, 128)            # padded final-linear output width
    bf = jnp.bfloat16

    packed = {
        "emb_ref": params["emb_ref"],
        "emb_node": params["emb_node"],
        "GP": GP, "HP": HP, "NO": NO,
        # 1.0 on forward-direction lanes inside each gate slot
        "fwd_mask": jnp.tile((jnp.arange(GP) < H).astype(jnp.float32),
                             3).reshape(1, G3),
        "gru": [],
    }

    in_dims = [num_features] + [D2] * (n_layers - 1)
    in_pads = [num_features] + [GP] * (n_layers - 1)   # layer>=1 input stays GP-padded
    for l in range(n_layers):
        pf, pb = params["gru"][l]
        In, InP = in_dims[l], in_pads[l]
        wih_c = jnp.zeros((InP, G3), jnp.float32)
        whh_c = jnp.zeros((GP, G3), jnp.float32)
        bih_c = jnp.zeros((G3,), jnp.float32)
        bhh_c = jnp.zeros((G3,), jnp.float32)
        wihf, wihb = pf["w_ih"].T, pb["w_ih"].T      # [In, 3H]
        whhf, whhb = pf["w_hh"].T, pb["w_hh"].T      # [H, 3H]
        for g in range(3):                            # gate order (r, z, n)
            c = g * GP
            wih_c = wih_c.at[0:In, c:c + H].set(wihf[:, g * H:(g + 1) * H])
            wih_c = wih_c.at[0:In, c + H:c + D2].set(wihb[:, g * H:(g + 1) * H])
            whh_c = whh_c.at[0:H, c:c + H].set(whhf[:, g * H:(g + 1) * H])
            whh_c = whh_c.at[H:D2, c + H:c + D2].set(whhb[:, g * H:(g + 1) * H])
            bih_c = bih_c.at[c:c + H].set(pf["b_ih"][g * H:(g + 1) * H])
            bih_c = bih_c.at[c + H:c + D2].set(pb["b_ih"][g * H:(g + 1) * H])
            bhh_c = bhh_c.at[c:c + H].set(pf["b_hh"][g * H:(g + 1) * H])
            bhh_c = bhh_c.at[c + H:c + D2].set(pb["b_hh"][g * H:(g + 1) * H])
        packed["gru"].append({
            "wih_c": wih_c.astype(bf),
            "whh_c": whh_c.astype(bf),
            "bih_c": bih_c.reshape(1, G3),
            "bhh_c": bhh_c.reshape(1, G3),
        })

    # GatedGraphConv: padded gate slots [r | z | gi_n | gh_n], each HP lanes.
    wih_t = params["ggc_wih"].T      # [H, 3H]
    whh_t = params["ggc_whh"].T      # [H, 3H]
    bih, bhh = params["ggc_bih"], params["ggc_bhh"]
    steps = params["ggc_w"].shape[0]
    w_msg = jnp.zeros((steps, HP, HP), jnp.float32).at[:, 0:H, 0:H].set(params["ggc_w"])
    wg_a = jnp.zeros((HP, 4 * HP), jnp.float32)
    wg_h = jnp.zeros((HP, 4 * HP), jnp.float32)
    bg = jnp.zeros((4 * HP,), jnp.float32)
    wg_a = wg_a.at[0:H, 0:H].set(wih_t[:, 0:H])
    wg_a = wg_a.at[0:H, HP:HP + H].set(wih_t[:, H:2 * H])
    wg_a = wg_a.at[0:H, 2 * HP:2 * HP + H].set(wih_t[:, 2 * H:3 * H])
    wg_h = wg_h.at[0:H, 0:H].set(whh_t[:, 0:H])
    wg_h = wg_h.at[0:H, HP:HP + H].set(whh_t[:, H:2 * H])
    wg_h = wg_h.at[0:H, 3 * HP:3 * HP + H].set(whh_t[:, 2 * H:3 * H])
    bg = bg.at[0:H].set(bih[0:H] + bhh[0:H])
    bg = bg.at[HP:HP + H].set(bih[H:2 * H] + bhh[H:2 * H])
    bg = bg.at[2 * HP:2 * HP + H].set(bih[2 * H:3 * H])
    bg = bg.at[3 * HP:3 * HP + H].set(bhh[2 * H:3 * H])
    packed["ggc"] = {"w_msg": w_msg.astype(bf), "wg_a": wg_a.astype(bf),
                     "wg_h": wg_h.astype(bf), "bg": bg.reshape(1, 4 * HP)}

    # Final Linear(3H -> 2H): concat folded away by splitting W^T; rows padded
    # to the GP/HP activation layouts, output columns padded to NO lanes.
    Wt = params["W_w"].T                                  # [3H, 2H]
    W1 = jnp.zeros((GP, NO), jnp.float32).at[0:D2, 0:D2].set(Wt[0:D2])
    W2 = jnp.zeros((HP, NO), jnp.float32).at[0:H, 0:D2].set(Wt[D2:3 * H])
    Wb = jnp.zeros((NO,), jnp.float32).at[0:D2].set(params["W_b"])
    packed["W1"] = W1.astype(bf)
    packed["W2"] = W2.astype(bf)
    packed["W_b"] = Wb.reshape(1, NO)
    return packed


# ----------------------------------------------------------------------------
# Forward pass
# ----------------------------------------------------------------------------
def encoder_forward(packed, input_ids, node_ids, edge_index, map_idx,
                    len_context, *, hid_dim, n_layers):
    H = hid_dim
    GP, HP = packed["GP"], packed["HP"]
    B, T = input_ids.shape

    # ---- embedding(input); dropout = identity (eval). Time-major rows.
    seq2d = packed["emb_ref"][input_ids.T].reshape(T * B, -1).astype(jnp.bfloat16)

    # ---- bidirectional, multi-layer GRU (one kernel per layer) ----
    hiddens = []
    outs = None
    for l in range(n_layers):
        outs, hN = gru_layer(seq2d, packed["gru"][l], packed["fwd_mask"],
                             T=T, B=B, GP=GP)
        hiddens.append(hN[:, :H])                           # layer-l forward
        hiddens.append(hN[:, H:2 * H])                      # layer-l backward
        seq2d = outs.reshape(T * B, GP)                     # lane-dense bf16 feed
    hidden = jnp.stack(hiddens, axis=0)                     # [2*n_layers, B, H]

    # batch-major rows for the final projection (matches map layout)
    rnn_rows = jnp.transpose(outs, (1, 0, 2)).reshape(B * T, GP)   # bf16

    # ---- node embedding + GatedGraphConv (dropout = identity) ----
    nodes = packed["emb_node"][node_ids]                    # [N, F]
    N, F = nodes.shape
    nodes = jnp.concatenate(
        [nodes, jnp.zeros((N, HP - F), jnp.float32)], axis=-1)     # zero-pad to HP
    src, dst = edge_index[0], edge_index[1]
    adj = (jnp.zeros((N, N), jnp.float32).at[dst, src].add(1.0)
           ).astype(jnp.bfloat16)                           # adj[dst, src] = #edges
    nodes_out = gated_graph_conv(nodes, adj, packed["ggc"])  # [N, HP] f32

    # ---- fused node selection + length mask + final projection ----
    t_pos = jnp.arange(T, dtype=jnp.int32)[None, :]
    valid = t_pos < len_context[:, None]
    masked_map = jnp.where(valid, map_idx, -1).reshape(B * T, 1).astype(jnp.int32)

    out_p = cat_linear(rnn_rows, nodes_out.astype(jnp.bfloat16), masked_map,
                       packed["W1"], packed["W2"], packed["W_b"])   # [B*T, NO]
    outputs = out_p[:, :2 * H].reshape(B, T, 2 * H)
    return outputs, hidden


# ----------------------------------------------------------------------------
if __name__ == "__main__":
    # small config consistent with the module
    B, T = 2, 8                 # batch_size, sequence length
    F, H = 16, 32               # num_features, hid_dim
    n_layers = 2
    ref_size, node_size = 50, 40
    N_nodes, E = 24, 48

    key = jax.random.PRNGKey(0)
    kp, k1, k2, k3, k4 = jax.random.split(key, 5)

    params = init_params(kp, ref_size=ref_size, node_size=node_size,
                         num_features=F, hid_dim=H, n_layers=n_layers)
    packed = pack_params(params, num_features=F, hid_dim=H, n_layers=n_layers)

    input_ids = jax.random.randint(k1, (B, T), 1, ref_size, dtype=jnp.int32)
    node_ids = jax.random.randint(k2, (N_nodes,), 1, node_size, dtype=jnp.int32)
    edge_index = jax.random.randint(k3, (2, E), 0, N_nodes, dtype=jnp.int32)
    map_idx = jax.random.randint(k4, (B, T), 0, N_nodes, dtype=jnp.int32)
    len_context = jnp.array([5, 8], dtype=jnp.int32)

    outputs, hidden = encoder_forward(
        packed, input_ids, node_ids, edge_index, map_idx, len_context,
        hid_dim=H, n_layers=n_layers)

    outputs = jax.block_until_ready(outputs)
    hidden = jax.block_until_ready(hidden)

    assert outputs.shape == (B, T, 2 * H), outputs.shape
    assert hidden.shape == (2 * n_layers, B, H), hidden.shape
    assert jnp.all(jnp.isfinite(outputs)) and jnp.all(jnp.isfinite(hidden))
    print("KERNEL_OK")
</pallas_src>

<mosaic_0001>
module attributes {stable_mosaic.version = 11 : i64} {
  func.func @_gru_layer_kernel(%arg0: memref<16x16xbf16, #tpu.memory_space<vmem>>, %arg1: memref<16x384xbf16, #tpu.memory_space<vmem>>, %arg2: memref<1x384xf32, #tpu.memory_space<vmem>>, %arg3: memref<128x384xbf16, #tpu.memory_space<vmem>>, %arg4: memref<1x384xf32, #tpu.memory_space<vmem>>, %arg5: memref<1x384xf32, #tpu.memory_space<vmem>>, %arg6: memref<8x2x128xbf16, #tpu.memory_space<vmem>>, %arg7: memref<2x128xf32, #tpu.memory_space<vmem>>, %arg8: memref<16x384xbf16, #tpu.memory_space<vmem>>) attributes {dimension_semantics = [], scalar_prefetch = 0 : i64, scratch_operands = 1 : i64, tpu.core_type = #tpu.core_type<tc>} {
    %c0 = arith.constant 0 : index
    %c0_0 = arith.constant 0 : index
    %0 = vector.load %arg0[%c0, %c0_0] : memref<16x16xbf16, #tpu.memory_space<vmem>>, vector<16x16xbf16>
    %c0_1 = arith.constant 0 : index
    %c0_2 = arith.constant 0 : index
    %1 = vector.load %arg1[%c0_1, %c0_2] : memref<16x384xbf16, #tpu.memory_space<vmem>>, vector<16x384xbf16>
    %cst = arith.constant dense<0.000000e+00> : vector<16x384xf32>
    %2 = tpu.matmul %0, %1, %cst {dimension_numbers = #tpu.dot_dimension_numbers<[1], [0], [0], [1], [0, 0, 1, 1], [], []>} : vector<16x16xbf16>, vector<16x384xbf16>, vector<16x384xf32> -> vector<16x384xf32>
    %c0_3 = arith.constant 0 : index
    %c0_4 = arith.constant 0 : index
    %3 = vector.load %arg2[%c0_3, %c0_4] : memref<1x384xf32, #tpu.memory_space<vmem>>, vector<1x384xf32>
    %4 = vector.broadcast %3 : vector<1x384xf32> to vector<16x384xf32>
    %5 = arith.addf %2, %4 : vector<16x384xf32>
    %6 = arith.truncf %5 : vector<16x384xf32> to vector<16x384xbf16>
    %c0_5 = arith.constant 0 : index
    %c0_6 = arith.constant 0 : index
    %7 = vector.load %arg8[%c0_5, %c0_6] : memref<16x384xbf16, #tpu.memory_space<vmem>>, vector<16x384xbf16>
    tpu.vector_store %arg8[%c0_5, %c0_6], %6 {strides = array<i32>} : memref<16x384xbf16, #tpu.memory_space<vmem>>, vector<16x384xbf16>,
    %c0_7 = arith.constant 0 : index
    %c0_8 = arith.constant 0 : index
    %8 = vector.load %arg3[%c0_7, %c0_8] : memref<128x384xbf16, #tpu.memory_space<vmem>>, vector<128x384xbf16>
    %c0_9 = arith.constant 0 : index
    %c0_10 = arith.constant 0 : index
    %9 = vector.load %arg4[%c0_9, %c0_10] : memref<1x384xf32, #tpu.memory_space<vmem>>, vector<1x384xf32>
    %c0_11 = arith.constant 0 : index
    %c0_12 = arith.constant 0 : index
    %10 = vector.load %arg5[%c0_11, %c0_12] : memref<1x384xf32, #tpu.memory_space<vmem>>, vector<1x384xf32>
    %cst_13 = arith.constant 1.000000e+00 : f32
    %11 = vector.broadcast %cst_13 : f32 to vector<1x384xf32>
    %12 = arith.subf %11, %10 : vector<1x384xf32>
    %13 = vector.extract_strided_slice %10 {offsets = [0, 0], sizes = [1, 128], strides = [1, 1]} : vector<1x384xf32> to vector<1x128xf32>
    %cst_14 = arith.constant 1.000000e+00 : f32
    %14 = vector.broadcast %cst_14 : f32 to vector<1x128xf32>
    %15 = arith.subf %14, %13 : vector<1x128xf32>
    %cst_15 = arith.constant 0.000000e+00 : f32
    %16 = vector.broadcast %cst_15 : f32 to vector<2x128xf32>
    %c0_i32 = arith.constant 0 : i32
    %c2_i32 = arith.constant 2 : i32
    %17 = arith.muli %c0_i32, %c2_i32 : i32
    %18 = arith.index_cast %17 : i32 to index
    %c0_16 = arith.constant 0 : index
    %19 = vector.load %arg8[%18, %c0_16] : memref<16x384xbf16, #tpu.memory_space<vmem>>, vector<2x384xbf16>
    %20 = arith.extf %19 : vector<2x384xbf16> to vector<2x384xf32>
    %c7_i32 = arith.constant 7 : i32
    %21 = arith.subi %c7_i32, %c0_i32 : i32
    %c2_i32_17 = arith.constant 2 : i32
    %22 = arith.muli %21, %c2_i32_17 : i32
    %23 = arith.index_cast %22 : i32 to index
    %c0_18 = arith.constant 0 : index
    %24 = vector.load %arg8[%23, %c0_18] : memref<16x384xbf16, #tpu.memory_space<vmem>>, vector<2x384xbf16>
    %25 = arith.extf %24 : vector<2x384xbf16> to vector<2x384xf32>
    %26 = vector.broadcast %10 : vector<1x384xf32> to vector<2x384xf32>
    %27 = arith.mulf %26, %20 : vector<2x384xf32>
    %28 = vector.broadcast %12 : vector<1x384xf32> to vector<2x384xf32>
    %29 = arith.mulf %28, %25 : vector<2x384xf32>
    %30 = arith.addf %27, %29 : vector<2x384xf32>
    %31 = arith.truncf %16 : vector<2x128xf32> to vector<2x128xbf16>
    %cst_19 = arith.constant dense<0.000000e+00> : vector<2x384xf32>
    %32 = tpu.matmul %31, %8, %cst_19 {dimension_numbers = #tpu.dot_dimension_numbers<[1], [0], [0], [1], [0, 0, 1, 1], [], []>} : vector<2x128xbf16>, vector<128x384xbf16>, vector<2x384xf32> -> vector<2x384xf32>
    %33 = vector.broadcast %9 : vector<1x384xf32> to vector<2x384xf32>
    %34 = arith.addf %32, %33 : vector<2x384xf32>
    %35 = vector.extract_strided_slice %30 {offsets = [0, 0], sizes = [2, 128], strides = [1, 1]} : vector<2x384xf32> to vector<2x128xf32>
    %36 = vector.extract_strided_slice %34 {offsets = [0, 0], sizes = [2, 128], strides = [1, 1]} : vector<2x384xf32> to vector<2x128xf32>
    %37 = arith.addf %35, %36 : vector<2x128xf32>
    %38 = arith.negf %37 : vector<2x128xf32>
    %39 = math.exp %38 : vector<2x128xf32>
    %cst_20 = arith.constant 1.000000e+00 : f32
    %40 = vector.broadcast %cst_20 : f32 to vector<2x128xf32>
    %41 = arith.addf %40, %39 : vector<2x128xf32>
    %42 = arith.divf %40, %41 : vector<2x128xf32>
    %43 = vector.extract_strided_slice %30 {offsets = [0, 128], sizes = [2, 128], strides = [1, 1]} : vector<2x384xf32> to vector<2x128xf32>
    %44 = vector.extract_strided_slice %34 {offsets = [0, 128], sizes = [2, 128], strides = [1, 1]} : vector<2x384xf32> to vector<2x128xf32>
    %45 = arith.addf %43, %44 : vector<2x128xf32>
    %46 = arith.negf %45 : vector<2x128xf32>
    %47 = math.exp %46 : vector<2x128xf32>
    %cst_21 = arith.constant 1.000000e+00 : f32
    %48 = vector.broadcast %cst_21 : f32 to vector<2x128xf32>
    %49 = arith.addf %48, %47 : vector<2x128xf32>
    %50 = arith.divf %48, %49 : vector<2x128xf32>
    %51 = vector.extract_strided_slice %30 {offsets = [0, 256], sizes = [2, 128], strides = [1, 1]} : vector<2x384xf32> to vector<2x128xf32>
    %52 = vector.extract_strided_slice %34 {offsets = [0, 256], sizes = [2, 128], strides = [1, 1]} : vector<2x384xf32> to vector<2x128xf32>
    %53 = arith.mulf %42, %52 : vector<2x128xf32>
    %54 = arith.addf %51, %53 : vector<2x128xf32>
    %55 = math.tanh %54 : vector<2x128xf32>
    %cst_22 = arith.constant 1.000000e+00 : f32
    %56 = vector.broadcast %cst_22 : f32 to vector<2x128xf32>
    %57 = arith.subf %56, %50 : vector<2x128xf32>
    %58 = arith.mulf %57, %55 : vector<2x128xf32>
    %59 = arith.mulf %50, %16 : vector<2x128xf32>
    %60 = arith.addf %58, %59 : vector<2x128xf32>
    %61 = arith.truncf %60 : vector<2x128xf32> to vector<2x128xbf16>
    %62 = arith.index_cast %c0_i32 : i32 to index
    %c0_23 = arith.constant 0 : index
    %c0_24 = arith.constant 0 : index
    %63 = vector.load %arg6[%62, %c0_23, %c0_24] : memref<8x2x128xbf16, #tpu.memory_space<vmem>>, vector<1x2x128xbf16>
    %64 = vector.shape_cast %63 : vector<1x2x128xbf16> to vector<2x128xbf16>
    %65 = vector.shape_cast %61 : vector<2x128xbf16> to vector<1x2x128xbf16>
    tpu.vector_store %arg6[%62, %c0_23, %c0_24], %65 {strides = array<i32>} : memref<8x2x128xbf16, #tpu.memory_space<vmem>>, vector<1x2x128xbf16>,
    %c1_i32 = arith.constant 1 : i32
    %c2_i32_25 = arith.constant 2 : i32
    %66 = arith.muli %c1_i32, %c2_i32_25 : i32
    %67 = arith.index_cast %66 : i32 to index
    %c0_26 = arith.constant 0 : index
    %68 = vector.load %arg8[%67, %c0_26] : memref<16x384xbf16, #tpu.memory_space<vmem>>, vector<2x384xbf16>
    %69 = arith.extf %68 : vector<2x384xbf16> to vector<2x384xf32>
    %c7_i32_27 = arith.constant 7 : i32
    %70 = arith.subi %c7_i32_27, %c1_i32 : i32
    %c2_i32_28 = arith.constant 2 : i32
    %71 = arith.muli %70, %c2_i32_28 : i32
    %72 = arith.index_cast %71 : i32 to index
    %c0_29 = arith.constant 0 : index
    %73 = vector.load %arg8[%72, %c0_29] : memref<16x384xbf16, #tpu.memory_space<vmem>>, vector<2x384xbf16>
    %74 = arith.extf %73 : vector<2x384xbf16> to vector<2x384xf32>
    %75 = vector.broadcast %10 : vector<1x384xf32> to vector<2x384xf32>
    %76 = arith.mulf %75, %69 : vector<2x384xf32>
    %77 = vector.broadcast %12 : vector<1x384xf32> to vector<2x384xf32>
    %78 = arith.mulf %77, %74 : vector<2x384xf32>
    %79 = arith.addf %76, %78 : vector<2x384xf32>
    %80 = arith.truncf %60 : vector<2x128xf32> to vector<2x128xbf16>
    %cst_30 = arith.constant dense<0.000000e+00> : vector<2x384xf32>
    %81 = tpu.matmul %80, %8, %cst_30 {dimension_numbers = #tpu.dot_dimension_numbers<[1], [0], [0], [1], [0, 0, 1, 1], [], []>} : vector<2x128xbf16>, vector<128x384xbf16>, vector<2x384xf32> -> vector<2x384xf32>
    %82 = vector.broadcast %9 : vector<1x384xf32> to vector<2x384xf32>
    %83 = arith.addf %81, %82 : vector<2x384xf32>
    %84 = vector.extract_strided_slice %79 {offsets = [0, 0], sizes = [2, 128], strides = [1, 1]} : vector<2x384xf32> to vector<2x128xf32>
    %85 = vector.extract_strided_slice %83 {offsets = [0, 0], sizes = [2, 128], strides = [1, 1]} : vector<2x384xf32> to vector<2x128xf32>
    %86 = arith.addf %84, %85 : vector<2x128xf32>
    %87 = arith.negf %86 : vector<2x128xf32>
    %88 = math.exp %87 : vector<2x128xf32>
    %cst_31 = arith.constant 1.000000e+00 : f32
    %89 = vector.broadcast %cst_31 : f32 to vector<2x128xf32>
    %90 = arith.addf %89, %88 : vector<2x128xf32>
    %91 = arith.divf %89, %90 : vector<2x128xf32>
    %92 = vector.extract_strided_slice %79 {offsets = [0, 128], sizes = [2, 128], strides = [1, 1]} : vector<2x384xf32> to vector<2x128xf32>
    %93 = vector.extract_strided_slice %83 {offsets = [0, 128], sizes = [2, 128], strides = [1, 1]} : vector<2x384xf32> to vector<2x128xf32>
    %94 = arith.addf %92, %93 : vector<2x128xf32>
    %95 = arith.negf %94 : vector<2x128xf32>
    %96 = math.exp %95 : vector<2x128xf32>
    %cst_32 = arith.constant 1.000000e+00 : f32
    %97 = vector.broadcast %cst_32 : f32 to vector<2x128xf32>
    %98 = arith.addf %97, %96 : vector<2x128xf32>
    %99 = arith.divf %97, %98 : vector<2x128xf32>
    %100 = vector.extract_strided_slice %79 {offsets = [0, 256], sizes = [2, 128], strides = [1, 1]} : vector<2x384xf32> to vector<2x128xf32>
    %101 = vector.extract_strided_slice %83 {offsets = [0, 256], sizes = [2, 128], strides = [1, 1]} : vector<2x384xf32> to vector<2x128xf32>
    %102 = arith.mulf %91, %101 : vector<2x128xf32>
    %103 = arith.addf %100, %102 : vector<2x128xf32>
    %104 = math.tanh %103 : vector<2x128xf32>
    %cst_33 = arith.constant 1.000000e+00 : f32
    %105 = vector.broadcast %cst_33 : f32 to vector<2x128xf32>
    %106 = arith.subf %105, %99 : vector<2x128xf32>
    %107 = arith.mulf %106, %104 : vector<2x128xf32>
    %108 = arith.mulf %99, %60 : vector<2x128xf32>
    %109 = arith.addf %107, %108 : vector<2x128xf32>
    %110 = arith.truncf %109 : vector<2x128xf32> to vector<2x128xbf16>
    %111 = arith.index_cast %c1_i32 : i32 to index
    %c0_34 = arith.constant 0 : index
    %c0_35 = arith.constant 0 : index
    %112 = vector.load %arg6[%111, %c0_34, %c0_35] : memref<8x2x128xbf16, #tpu.memory_space<vmem>>, vector<1x2x128xbf16>
    %113 = vector.shape_cast %112 : vector<1x2x128xbf16> to vector<2x128xbf16>
    %114 = vector.shape_cast %110 : vector<2x128xbf16> to vector<1x2x128xbf16>
    tpu.vector_store %arg6[%111, %c0_34, %c0_35], %114 {strides = array<i32>} : memref<8x2x128xbf16, #tpu.memory_space<vmem>>, vector<1x2x128xbf16>,
    %c2_i32_36 = arith.constant 2 : i32
    %c2_i32_37 = arith.constant 2 : i32
    %115 = arith.muli %c2_i32_36, %c2_i32_37 : i32
    %116 = arith.index_cast %115 : i32 to index
    %c0_38 = arith.constant 0 : index
    %117 = vector.load %arg8[%116, %c0_38] : memref<16x384xbf16, #tpu.memory_space<vmem>>, vector<2x384xbf16>
    %118 = arith.extf %117 : vector<2x384xbf16> to vector<2x384xf32>
    %c7_i32_39 = arith.constant 7 : i32
    %119 = arith.subi %c7_i32_39, %c2_i32_36 : i32
    %c2_i32_40 = arith.constant 2 : i32
    %120 = arith.muli %119, %c2_i32_40 : i32
    %121 = arith.index_cast %120 : i32 to index
    %c0_41 = arith.constant 0 : index
    %122 = vector.load %arg8[%121, %c0_41] : memref<16x384xbf16, #tpu.memory_space<vmem>>, vector<2x384xbf16>
    %123 = arith.extf %122 : vector<2x384xbf16> to vector<2x384xf32>
    %124 = vector.broadcast %10 : vector<1x384xf32> to vector<2x384xf32>
    %125 = arith.mulf %124, %118 : vector<2x384xf32>
    %126 = vector.broadcast %12 : vector<1x384xf32> to vector<2x384xf32>
    %127 = arith.mulf %126, %123 : vector<2x384xf32>
    %128 = arith.addf %125, %127 : vector<2x384xf32>
    %129 = arith.truncf %109 : vector<2x128xf32> to vector<2x128xbf16>
    %cst_42 = arith.constant dense<0.000000e+00> : vector<2x384xf32>
    %130 = tpu.matmul %129, %8, %cst_42 {dimension_numbers = #tpu.dot_dimension_numbers<[1], [0], [0], [1], [0, 0, 1, 1], [], []>} : vector<2x128xbf16>, vector<128x384xbf16>, vector<2x384xf32> -> vector<2x384xf32>
    %131 = vector.broadcast %9 : vector<1x384xf32> to vector<2x384xf32>
    %132 = arith.addf %130, %131 : vector<2x384xf32>
    %133 = vector.extract_strided_slice %128 {offsets = [0, 0], sizes = [2, 128], strides = [1, 1]} : vector<2x384xf32> to vector<2x128xf32>
    %134 = vector.extract_strided_slice %132 {offsets = [0, 0], sizes = [2, 128], strides = [1, 1]} : vector<2x384xf32> to vector<2x128xf32>
    %135 = arith.addf %133, %134 : vector<2x128xf32>
    %136 = arith.negf %135 : vector<2x128xf32>
    %137 = math.exp %136 : vector<2x128xf32>
    %cst_43 = arith.constant 1.000000e+00 : f32
    %138 = vector.broadcast %cst_43 : f32 to vector<2x128xf32>
    %139 = arith.addf %138, %137 : vector<2x128xf32>
    %140 = arith.divf %138, %139 : vector<2x128xf32>
    %141 = vector.extract_strided_slice %128 {offsets = [0, 128], sizes = [2, 128], strides = [1, 1]} : vector<2x384xf32> to vector<2x128xf32>
    %142 = vector.extract_strided_slice %132 {offsets = [0, 128], sizes = [2, 128], strides = [1, 1]} : vector<2x384xf32> to vector<2x128xf32>
    %143 = arith.addf %141, %142 : vector<2x128xf32>
    %144 = arith.negf %143 : vector<2x128xf32>
    %145 = math.exp %144 : vector<2x128xf32>
    %cst_44 = arith.constant 1.000000e+00 : f32
    %146 = vector.broadcast %cst_44 : f32 to vector<2x128xf32>
    %147 = arith.addf %146, %145 : vector<2x128xf32>
    %148 = arith.divf %146, %147 : vector<2x128xf32>
    %149 = vector.extract_strided_slice %128 {offsets = [0, 256], sizes = [2, 128], strides = [1, 1]} : vector<2x384xf32> to vector<2x128xf32>
    %150 = vector.extract_strided_slice %132 {offsets = [0, 256], sizes = [2, 128], strides = [1, 1]} : vector<2x384xf32> to vector<2x128xf32>
    %151 = arith.mulf %140, %150 : vector<2x128xf32>
    %152 = arith.addf %149, %151 : vector<2x128xf32>
    %153 = math.tanh %152 : vector<2x128xf32>
    %cst_45 = arith.constant 1.000000e+00 : f32
    %154 = vector.broadcast %cst_45 : f32 to vector<2x128xf32>
    %155 = arith.subf %154, %148 : vector<2x128xf32>
    %156 = arith.mulf %155, %153 : vector<2x128xf32>
    %157 = arith.mulf %148, %109 : vector<2x128xf32>
    %158 = arith.addf %156, %157 : vector<2x128xf32>
    %159 = arith.truncf %158 : vector<2x128xf32> to vector<2x128xbf16>
    %160 = arith.index_cast %c2_i32_36 : i32 to index
    %c0_46 = arith.constant 0 : index
    %c0_47 = arith.constant 0 : index
    %161 = vector.load %arg6[%160, %c0_46, %c0_47] : memref<8x2x128xbf16, #tpu.memory_space<vmem>>, vector<1x2x128xbf16>
    %162 = vector.shape_cast %161 : vector<1x2x128xbf16> to vector<2x128xbf16>
    %163 = vector.shape_cast %159 : vector<2x128xbf16> to vector<1x2x128xbf16>
    tpu.vector_store %arg6[%160, %c0_46, %c0_47], %163 {strides = array<i32>} : memref<8x2x128xbf16, #tpu.memory_space<vmem>>, vector<1x2x128xbf16>,
    %c3_i32 = arith.constant 3 : i32
    %c2_i32_48 = arith.constant 2 : i32
    %164 = arith.muli %c3_i32, %c2_i32_48 : i32
    %165 = arith.index_cast %164 : i32 to index
    %c0_49 = arith.constant 0 : index
    %166 = vector.load %arg8[%165, %c0_49] : memref<16x384xbf16, #tpu.memory_space<vmem>>, vector<2x384xbf16>
    %167 = arith.extf %166 : vector<2x384xbf16> to vector<2x384xf32>
    %c7_i32_50 = arith.constant 7 : i32
    %168 = arith.subi %c7_i32_50, %c3_i32 : i32
    %c2_i32_51 = arith.constant 2 : i32
    %169 = arith.muli %168, %c2_i32_51 : i32
    %170 = arith.index_cast %169 : i32 to index
    %c0_52 = arith.constant 0 : index
    %171 = vector.load %arg8[%170, %c0_52] : memref<16x384xbf16, #tpu.memory_space<vmem>>, vector<2x384xbf16>
    %172 = arith.extf %171 : vector<2x384xbf16> to vector<2x384xf32>
    %173 = vector.broadcast %10 : vector<1x384xf32> to vector<2x384xf32>
    %174 = arith.mulf %173, %167 : vector<2x384xf32>
    %175 = vector.broadcast %12 : vector<1x384xf32> to vector<2x384xf32>
    %176 = arith.mulf %175, %172 : vector<2x384xf32>
    %177 = arith.addf %174, %176 : vector<2x384xf32>
    %178 = arith.truncf %158 : vector<2x128xf32> to vector<2x128xbf16>
    %cst_53 = arith.constant dense<0.000000e+00> : vector<2x384xf32>
    %179 = tpu.matmul %178, %8, %cst_53 {dimension_numbers = #tpu.dot_dimension_numbers<[1], [0], [0], [1], [0, 0, 1, 1], [], []>} : vector<2x128xbf16>, vector<128x384xbf16>, vector<2x384xf32> -> vector<2x384xf32>
    %180 = vector.broadcast %9 : vector<1x384xf32> to vector<2x384xf32>
    %181 = arith.addf %179, %180 : vector<2x384xf32>
    %182 = vector.extract_strided_slice %177 {offsets = [0, 0], sizes = [2, 128], strides = [1, 1]} : vector<2x384xf32> to vector<2x128xf32>
    %183 = vector.extract_strided_slice %181 {offsets = [0, 0], sizes = [2, 128], strides = [1, 1]} : vector<2x384xf32> to vector<2x128xf32>
    %184 = arith.addf %182, %183 : vector<2x128xf32>
    %185 = arith.negf %184 : vector<2x128xf32>
    %186 = math.exp %185 : vector<2x128xf32>
    %cst_54 = arith.constant 1.000000e+00 : f32
    %187 = vector.broadcast %cst_54 : f32 to vector<2x128xf32>
    %188 = arith.addf %187, %186 : vector<2x128xf32>
    %189 = arith.divf %187, %188 : vector<2x128xf32>
    %190 = vector.extract_strided_slice %177 {offsets = [0, 128], sizes = [2, 128], strides = [1, 1]} : vector<2x384xf32> to vector<2x128xf32>
    %191 = vector.extract_strided_slice %181 {offsets = [0, 128], sizes = [2, 128], strides = [1, 1]} : vector<2x384xf32> to vector<2x128xf32>
    %192 = arith.addf %190, %191 : vector<2x128xf32>
    %193 = arith.negf %192 : vector<2x128xf32>
    %194 = math.exp %193 : vector<2x128xf32>
    %cst_55 = arith.constant 1.000000e+00 : f32
    %195 = vector.broadcast %cst_55 : f32 to vector<2x128xf32>
    %196 = arith.addf %195, %194 : vector<2x128xf32>
    %197 = arith.divf %195, %196 : vector<2x128xf32>
    %198 = vector.extract_strided_slice %177 {offsets = [0, 256], sizes = [2, 128], strides = [1, 1]} : vector<2x384xf32> to vector<2x128xf32>
    %199 = vector.extract_strided_slice %181 {offsets = [0, 256], sizes = [2, 128], strides = [1, 1]} : vector<2x384xf32> to vector<2x128xf32>
    %200 = arith.mulf %189, %199 : vector<2x128xf32>
    %201 = arith.addf %198, %200 : vector<2x128xf32>
    %202 = math.tanh %201 : vector<2x128xf32>
    %cst_56 = arith.constant 1.000000e+00 : f32
    %203 = vector.broadcast %cst_56 : f32 to vector<2x128xf32>
    %204 = arith.subf %203, %197 : vector<2x128xf32>
    %205 = arith.mulf %204, %202 : vector<2x128xf32>
    %206 = arith.mulf %197, %158 : vector<2x128xf32>
    %207 = arith.addf %205, %206 : vector<2x128xf32>
    %208 = arith.truncf %207 : vector<2x128xf32> to vector<2x128xbf16>
    %209 = arith.index_cast %c3_i32 : i32 to index
    %c0_57 = arith.constant 0 : index
    %c0_58 = arith.constant 0 : index
    %210 = vector.load %arg6[%209, %c0_57, %c0_58] : memref<8x2x128xbf16, #tpu.memory_space<vmem>>, vector<1x2x128xbf16>
    %211 = vector.shape_cast %210 : vector<1x2x128xbf16> to vector<2x128xbf16>
    %212 = vector.shape_cast %208 : vector<2x128xbf16> to vector<1x2x128xbf16>
    tpu.vector_store %arg6[%209, %c0_57, %c0_58], %212 {strides = array<i32>} : memref<8x2x128xbf16, #tpu.memory_space<vmem>>, vector<1x2x128xbf16>,
    %c4_i32 = arith.constant 4 : i32
    %c2_i32_59 = arith.constant 2 : i32
    %213 = arith.muli %c4_i32, %c2_i32_59 : i32
    %214 = arith.index_cast %213 : i32 to index
    %c0_60 = arith.constant 0 : index
    %215 = vector.load %arg8[%214, %c0_60] : memref<16x384xbf16, #tpu.memory_space<vmem>>, vector<2x384xbf16>
    %216 = arith.extf %215 : vector<2x384xbf16> to vector<2x384xf32>
    %c7_i32_61 = arith.constant 7 : i32
    %217 = arith.subi %c7_i32_61, %c4_i32 : i32
    %c2_i32_62 = arith.constant 2 : i32
    %218 = arith.muli %217, %c2_i32_62 : i32
    %219 = arith.index_cast %218 : i32 to index
    %c0_63 = arith.constant 0 : index
    %220 = vector.load %arg8[%219, %c0_63] : memref<16x384xbf16, #tpu.memory_space<vmem>>, vector<2x384xbf16>
    %221 = arith.extf %220 : vector<2x384xbf16> to vector<2x384xf32>
    %222 = vector.broadcast %10 : vector<1x384xf32> to vector<2x384xf32>
    %223 = arith.mulf %222, %216 : vector<2x384xf32>
    %224 = vector.broadcast %12 : vector<1x384xf32> to vector<2x384xf32>
    %225 = arith.mulf %224, %221 : vector<2x384xf32>
    %226 = arith.addf %223, %225 : vector<2x384xf32>
    %227 = arith.truncf %207 : vector<2x128xf32> to vector<2x128xbf16>
    %cst_64 = arith.constant dense<0.000000e+00> : vector<2x384xf32>
    %228 = tpu.matmul %227, %8, %cst_64 {dimension_numbers = #tpu.dot_dimension_numbers<[1], [0], [0], [1], [0, 0, 1, 1], [], []>} : vector<2x128xbf16>, vector<128x384xbf16>, vector<2x384xf32> -> vector<2x384xf32>
    %229 = vector.broadcast %9 : vector<1x384xf32> to vector<2x384xf32>
    %230 = arith.addf %228, %229 : vector<2x384xf32>
    %231 = vector.extract_strided_slice %226 {offsets = [0, 0], sizes = [2, 128], strides = [1, 1]} : vector<2x384xf32> to vector<2x128xf32>
    %232 = vector.extract_strided_slice %230 {offsets = [0, 0], sizes = [2, 128], strides = [1, 1]} : vector<2x384xf32> to vector<2x128xf32>
    %233 = arith.addf %231, %232 : vector<2x128xf32>
    %234 = arith.negf %233 : vector<2x128xf32>
    %235 = math.exp %234 : vector<2x128xf32>
    %cst_65 = arith.constant 1.000000e+00 : f32
    %236 = vector.broadcast %cst_65 : f32 to vector<2x128xf32>
    %237 = arith.addf %236, %235 : vector<2x128xf32>
    %238 = arith.divf %236, %237 : vector<2x128xf32>
    %239 = vector.extract_strided_slice %226 {offsets = [0, 128], sizes = [2, 128], strides = [1, 1]} : vector<2x384xf32> to vector<2x128xf32>
    %240 = vector.extract_strided_slice %230 {offsets = [0, 128], sizes = [2, 128], strides = [1, 1]} : vector<2x384xf32> to vector<2x128xf32>
    %241 = arith.addf %239, %240 : vector<2x128xf32>
    %242 = arith.negf %241 : vector<2x128xf32>
    %243 = math.exp %242 : vector<2x128xf32>
    %cst_66 = arith.constant 1.000000e+00 : f32
    %244 = vector.broadcast %cst_66 : f32 to vector<2x128xf32>
    %245 = arith.addf %244, %243 : vector<2x128xf32>
    %246 = arith.divf %244, %245 : vector<2x128xf32>
    %247 = vector.extract_strided_slice %226 {offsets = [0, 256], sizes = [2, 128], strides = [1, 1]} : vector<2x384xf32> to vector<2x128xf32>
    %248 = vector.extract_strided_slice %230 {offsets = [0, 256], sizes = [2, 128], strides = [1, 1]} : vector<2x384xf32> to vector<2x128xf32>
    %249 = arith.mulf %238, %248 : vector<2x128xf32>
    %250 = arith.addf %247, %249 : vector<2x128xf32>
    %251 = math.tanh %250 : vector<2x128xf32>
    %cst_67 = arith.constant 1.000000e+00 : f32
    %252 = vector.broadcast %cst_67 : f32 to vector<2x128xf32>
    %253 = arith.subf %252, %246 : vector<2x128xf32>
    %254 = arith.mulf %253, %251 : vector<2x128xf32>
    %255 = arith.mulf %246, %207 : vector<2x128xf32>
    %256 = arith.addf %254, %255 : vector<2x128xf32>
    %257 = arith.truncf %256 : vector<2x128xf32> to vector<2x128xbf16>
    %258 = arith.index_cast %c4_i32 : i32 to index
    %c0_68 = arith.constant 0 : index
    %c0_69 = arith.constant 0 : index
    %259 = vector.load %arg6[%258, %c0_68, %c0_69] : memref<8x2x128xbf16, #tpu.memory_space<vmem>>, vector<1x2x128xbf16>
    %260 = vector.shape_cast %259 : vector<1x2x128xbf16> to vector<2x128xbf16>
    %261 = vector.shape_cast %257 : vector<2x128xbf16> to vector<1x2x128xbf16>
    tpu.vector_store %arg6[%258, %c0_68, %c0_69], %261 {strides = array<i32>} : memref<8x2x128xbf16, #tpu.memory_space<vmem>>, vector<1x2x128xbf16>,
    %c5_i32 = arith.constant 5 : i32
    %c2_i32_70 = arith.constant 2 : i32
    %262 = arith.muli %c5_i32, %c2_i32_70 : i32
    %263 = arith.index_cast %262 : i32 to index
    %c0_71 = arith.constant 0 : index
    %264 = vector.load %arg8[%263, %c0_71] : memref<16x384xbf16, #tpu.memory_space<vmem>>, vector<2x384xbf16>
    %265 = arith.extf %264 : vector<2x384xbf16> to vector<2x384xf32>
    %c7_i32_72 = arith.constant 7 : i32
    %266 = arith.subi %c7_i32_72, %c5_i32 : i32
    %c2_i32_73 = arith.constant 2 : i32
    %267 = arith.muli %266, %c2_i32_73 : i32
    %268 = arith.index_cast %267 : i32 to index
    %c0_74 = arith.constant 0 : index
    %269 = vector.load %arg8[%268, %c0_74] : memref<16x384xbf16, #tpu.memory_space<vmem>>, vector<2x384xbf16>
    %270 = arith.extf %269 : vector<2x384xbf16> to vector<2x384xf32>
    %271 = vector.broadcast %10 : vector<1x384xf32> to vector<2x384xf32>
    %272 = arith.mulf %271, %265 : vector<2x384xf32>
    %273 = vector.broadcast %12 : vector<1x384xf32> to vector<2x384xf32>
    %274 = arith.mulf %273, %270 : vector<2x384xf32>
    %275 = arith.addf %272, %274 : vector<2x384xf32>
    %276 = arith.truncf %256 : vector<2x128xf32> to vector<2x128xbf16>
    %cst_75 = arith.constant dense<0.000000e+00> : vector<2x384xf32>
    %277 = tpu.matmul %276, %8, %cst_75 {dimension_numbers = #tpu.dot_dimension_numbers<[1], [0], [0], [1], [0, 0, 1, 1], [], []>} : vector<2x128xbf16>, vector<128x384xbf16>, vector<2x384xf32> -> vector<2x384xf32>
    %278 = vector.broadcast %9 : vector<1x384xf32> to vector<2x384xf32>
    %279 = arith.addf %277, %278 : vector<2x384xf32>
    %280 = vector.extract_strided_slice %275 {offsets = [0, 0], sizes = [2, 128], strides = [1, 1]} : vector<2x384xf32> to vector<2x128xf32>
    %281 = vector.extract_strided_slice %279 {offsets = [0, 0], sizes = [2, 128], strides = [1, 1]} : vector<2x384xf32> to vector<2x128xf32>
    %282 = arith.addf %280, %281 : vector<2x128xf32>
    %283 = arith.negf %282 : vector<2x128xf32>
    %284 = math.exp %283 : vector<2x128xf32>
    %cst_76 = arith.constant 1.000000e+00 : f32
    %285 = vector.broadcast %cst_76 : f32 to vector<2x128xf32>
    %286 = arith.addf %285, %284 : vector<2x128xf32>
    %287 = arith.divf %285, %286 : vector<2x128xf32>
    %288 = vector.extract_strided_slice %275 {offsets = [0, 128], sizes = [2, 128], strides = [1, 1]} : vector<2x384xf32> to vector<2x128xf32>
    %289 = vector.extract_strided_slice %279 {offsets = [0, 128], sizes = [2, 128], strides = [1, 1]} : vector<2x384xf32> to vector<2x128xf32>
    %290 = arith.addf %288, %289 : vector<2x128xf32>
    %291 = arith.negf %290 : vector<2x128xf32>
    %292 = math.exp %291 : vector<2x128xf32>
    %cst_77 = arith.constant 1.000000e+00 : f32
    %293 = vector.broadcast %cst_77 : f32 to vector<2x128xf32>
    %294 = arith.addf %293, %292 : vector<2x128xf32>
    %295 = arith.divf %293, %294 : vector<2x128xf32>
    %296 = vector.extract_strided_slice %275 {offsets = [0, 256], sizes = [2, 128], strides = [1, 1]} : vector<2x384xf32> to vector<2x128xf32>
    %297 = vector.extract_strided_slice %279 {offsets = [0, 256], sizes = [2, 128], strides = [1, 1]} : vector<2x384xf32> to vector<2x128xf32>
    %298 = arith.mulf %287, %297 : vector<2x128xf32>
    %299 = arith.addf %296, %298 : vector<2x128xf32>
    %300 = math.tanh %299 : vector<2x128xf32>
    %cst_78 = arith.constant 1.000000e+00 : f32
    %301 = vector.broadcast %cst_78 : f32 to vector<2x128xf32>
    %302 = arith.subf %301, %295 : vector<2x128xf32>
    %303 = arith.mulf %302, %300 : vector<2x128xf32>
    %304 = arith.mulf %295, %256 : vector<2x128xf32>
    %305 = arith.addf %303, %304 : vector<2x128xf32>
    %306 = arith.truncf %305 : vector<2x128xf32> to vector<2x128xbf16>
    %307 = arith.index_cast %c5_i32 : i32 to index
    %c0_79 = arith.constant 0 : index
    %c0_80 = arith.constant 0 : index
    %308 = vector.load %arg6[%307, %c0_79, %c0_80] : memref<8x2x128xbf16, #tpu.memory_space<vmem>>, vector<1x2x128xbf16>
    %309 = vector.shape_cast %308 : vector<1x2x128xbf16> to vector<2x128xbf16>
    %310 = vector.shape_cast %306 : vector<2x128xbf16> to vector<1x2x128xbf16>
    tpu.vector_store %arg6[%307, %c0_79, %c0_80], %310 {strides = array<i32>} : memref<8x2x128xbf16, #tpu.memory_space<vmem>>, vector<1x2x128xbf16>,
    %c6_i32 = arith.constant 6 : i32
    %c2_i32_81 = arith.constant 2 : i32
    %311 = arith.muli %c6_i32, %c2_i32_81 : i32
    %312 = arith.index_cast %311 : i32 to index
    %c0_82 = arith.constant 0 : index
    %313 = vector.load %arg8[%312, %c0_82] : memref<16x384xbf16, #tpu.memory_space<vmem>>, vector<2x384xbf16>
    %314 = arith.extf %313 : vector<2x384xbf16> to vector<2x384xf32>
    %c7_i32_83 = arith.constant 7 : i32
    %315 = arith.subi %c7_i32_83, %c6_i32 : i32
    %c2_i32_84 = arith.constant 2 : i32
    %316 = arith.muli %315, %c2_i32_84 : i32
    %317 = arith.index_cast %316 : i32 to index
    %c0_85 = arith.constant 0 : index
    %318 = vector.load %arg8[%317, %c0_85] : memref<16x384xbf16, #tpu.memory_space<vmem>>, vector<2x384xbf16>
    %319 = arith.extf %318 : vector<2x384xbf16> to vector<2x384xf32>
    %320 = vector.broadcast %10 : vector<1x384xf32> to vector<2x384xf32>
    %321 = arith.mulf %320, %314 : vector<2x384xf32>
    %322 = vector.broadcast %12 : vector<1x384xf32> to vector<2x384xf32>
    %323 = arith.mulf %322, %319 : vector<2x384xf32>
    %324 = arith.addf %321, %323 : vector<2x384xf32>
    %325 = arith.truncf %305 : vector<2x128xf32> to vector<2x128xbf16>
    %cst_86 = arith.constant dense<0.000000e+00> : vector<2x384xf32>
    %326 = tpu.matmul %325, %8, %cst_86 {dimension_numbers = #tpu.dot_dimension_numbers<[1], [0], [0], [1], [0, 0, 1, 1], [], []>} : vector<2x128xbf16>, vector<128x384xbf16>, vector<2x384xf32> -> vector<2x384xf32>
    %327 = vector.broadcast %9 : vector<1x384xf32> to vector<2x384xf32>
    %328 = arith.addf %326, %327 : vector<2x384xf32>
    %329 = vector.extract_strided_slice %324 {offsets = [0, 0], sizes = [2, 128], strides = [1, 1]} : vector<2x384xf32> to vector<2x128xf32>
    %330 = vector.extract_strided_slice %328 {offsets = [0, 0], sizes = [2, 128], strides = [1, 1]} : vector<2x384xf32> to vector<2x128xf32>
    %331 = arith.addf %329, %330 : vector<2x128xf32>
    %332 = arith.negf %331 : vector<2x128xf32>
    %333 = math.exp %332 : vector<2x128xf32>
    %cst_87 = arith.constant 1.000000e+00 : f32
    %334 = vector.broadcast %cst_87 : f32 to vector<2x128xf32>
    %335 = arith.addf %334, %333 : vector<2x128xf32>
    %336 = arith.divf %334, %335 : vector<2x128xf32>
    %337 = vector.extract_strided_slice %324 {offsets = [0, 128], sizes = [2, 128], strides = [1, 1]} : vector<2x384xf32> to vector<2x128xf32>
    %338 = vector.extract_strided_slice %328 {offsets = [0, 128], sizes = [2, 128], strides = [1, 1]} : vector<2x384xf32> to vector<2x128xf32>
    %339 = arith.addf %337, %338 : vector<2x128xf32>
    %340 = arith.negf %339 : vector<2x128xf32>
    %341 = math.exp %340 : vector<2x128xf32>
    %cst_88 = arith.constant 1.000000e+00 : f32
    %342 = vector.broadcast %cst_88 : f32 to vector<2x128xf32>
    %343 = arith.addf %342, %341 : vector<2x128xf32>
    %344 = arith.divf %342, %343 : vector<2x128xf32>
    %345 = vector.extract_strided_slice %324 {offsets = [0, 256], sizes = [2, 128], strides = [1, 1]} : vector<2x384xf32> to vector<2x128xf32>
    %346 = vector.extract_strided_slice %328 {offsets = [0, 256], sizes = [2, 128], strides = [1, 1]} : vector<2x384xf32> to vector<2x128xf32>
    %347 = arith.mulf %336, %346 : vector<2x128xf32>
    %348 = arith.addf %345, %347 : vector<2x128xf32>
    %349 = math.tanh %348 : vector<2x128xf32>
    %cst_89 = arith.constant 1.000000e+00 : f32
    %350 = vector.broadcast %cst_89 : f32 to vector<2x128xf32>
    %351 = arith.subf %350, %344 : vector<2x128xf32>
    %352 = arith.mulf %351, %349 : vector<2x128xf32>
    %353 = arith.mulf %344, %305 : vector<2x128xf32>
    %354 = arith.addf %352, %353 : vector<2x128xf32>
    %355 = arith.truncf %354 : vector<2x128xf32> to vector<2x128xbf16>
    %356 = arith.index_cast %c6_i32 : i32 to index
    %c0_90 = arith.constant 0 : index
    %c0_91 = arith.constant 0 : index
    %357 = vector.load %arg6[%356, %c0_90, %c0_91] : memref<8x2x128xbf16, #tpu.memory_space<vmem>>, vector<1x2x128xbf16>
    %358 = vector.shape_cast %357 : vector<1x2x128xbf16> to vector<2x128xbf16>
    %359 = vector.shape_cast %355 : vector<2x128xbf16> to vector<1x2x128xbf16>
    tpu.vector_store %arg6[%356, %c0_90, %c0_91], %359 {strides = array<i32>} : memref<8x2x128xbf16, #tpu.memory_space<vmem>>, vector<1x2x128xbf16>,
    %c7_i32_92 = arith.constant 7 : i32
    %c2_i32_93 = arith.constant 2 : i32
    %360 = arith.muli %c7_i32_92, %c2_i32_93 : i32
    %361 = arith.index_cast %360 : i32 to index
    %c0_94 = arith.constant 0 : index
    %362 = vector.load %arg8[%361, %c0_94] : memref<16x384xbf16, #tpu.memory_space<vmem>>, vector<2x384xbf16>
    %363 = arith.extf %362 : vector<2x384xbf16> to vector<2x384xf32>
    %c7_i32_95 = arith.constant 7 : i32
    %364 = arith.subi %c7_i32_95, %c7_i32_92 : i32
    %c2_i32_96 = arith.constant 2 : i32
    %365 = arith.muli %364, %c2_i32_96 : i32
    %366 = arith.index_cast %365 : i32 to index
    %c0_97 = arith.constant 0 : index
    %367 = vector.load %arg8[%366, %c0_97] : memref<16x384xbf16, #tpu.memory_space<vmem>>, vector<2x384xbf16>
    %368 = arith.extf %367 : vector<2x384xbf16> to vector<2x384xf32>
    %369 = vector.broadcast %10 : vector<1x384xf32> to vector<2x384xf32>
    %370 = arith.mulf %369, %363 : vector<2x384xf32>
    %371 = vector.broadcast %12 : vector<1x384xf32> to vector<2x384xf32>
    %372 = arith.mulf %371, %368 : vector<2x384xf32>
    %373 = arith.addf %370, %372 : vector<2x384xf32>
    %374 = arith.truncf %354 : vector<2x128xf32> to vector<2x128xbf16>
    %cst_98 = arith.constant dense<0.000000e+00> : vector<2x384xf32>
    %375 = tpu.matmul %374, %8, %cst_98 {dimension_numbers = #tpu.dot_dimension_numbers<[1], [0], [0], [1], [0, 0, 1, 1], [], []>} : vector<2x128xbf16>, vector<128x384xbf16>, vector<2x384xf32> -> vector<2x384xf32>
    %376 = vector.broadcast %9 : vector<1x384xf32> to vector<2x384xf32>
    %377 = arith.addf %375, %376 : vector<2x384xf32>
    %378 = vector.extract_strided_slice %373 {offsets = [0, 0], sizes = [2, 128], strides = [1, 1]} : vector<2x384xf32> to vector<2x128xf32>
    %379 = vector.extract_strided_slice %377 {offsets = [0, 0], sizes = [2, 128], strides = [1, 1]} : vector<2x384xf32> to vector<2x128xf32>
    %380 = arith.addf %378, %379 : vector<2x128xf32>
    %381 = arith.negf %380 : vector<2x128xf32>
    %382 = math.exp %381 : vector<2x128xf32>
    %cst_99 = arith.constant 1.000000e+00 : f32
    %383 = vector.broadcast %cst_99 : f32 to vector<2x128xf32>
    %384 = arith.addf %383, %382 : vector<2x128xf32>
    %385 = arith.divf %383, %384 : vector<2x128xf32>
    %386 = vector.extract_strided_slice %373 {offsets = [0, 128], sizes = [2, 128], strides = [1, 1]} : vector<2x384xf32> to vector<2x128xf32>
    %387 = vector.extract_strided_slice %377 {offsets = [0, 128], sizes = [2, 128], strides = [1, 1]} : vector<2x384xf32> to vector<2x128xf32>
    %388 = arith.addf %386, %387 : vector<2x128xf32>
    %389 = arith.negf %388 : vector<2x128xf32>
    %390 = math.exp %389 : vector<2x128xf32>
    %cst_100 = arith.constant 1.000000e+00 : f32
    %391 = vector.broadcast %cst_100 : f32 to vector<2x128xf32>
    %392 = arith.addf %391, %390 : vector<2x128xf32>
    %393 = arith.divf %391, %392 : vector<2x128xf32>
    %394 = vector.extract_strided_slice %373 {offsets = [0, 256], sizes = [2, 128], strides = [1, 1]} : vector<2x384xf32> to vector<2x128xf32>
    %395 = vector.extract_strided_slice %377 {offsets = [0, 256], sizes = [2, 128], strides = [1, 1]} : vector<2x384xf32> to vector<2x128xf32>
    %396 = arith.mulf %385, %395 : vector<2x128xf32>
    %397 = arith.addf %394, %396 : vector<2x128xf32>
    %398 = math.tanh %397 : vector<2x128xf32>
    %cst_101 = arith.constant 1.000000e+00 : f32
    %399 = vector.broadcast %cst_101 : f32 to vector<2x128xf32>
    %400 = arith.subf %399, %393 : vector<2x128xf32>
    %401 = arith.mulf %400, %398 : vector<2x128xf32>
    %402 = arith.mulf %393, %354 : vector<2x128xf32>
    %403 = arith.addf %401, %402 : vector<2x128xf32>
    %404 = arith.truncf %403 : vector<2x128xf32> to vector<2x128xbf16>
    %405 = arith.index_cast %c7_i32_92 : i32 to index
    %c0_102 = arith.constant 0 : index
    %c0_103 = arith.constant 0 : index
    %406 = vector.load %arg6[%405, %c0_102, %c0_103] : memref<8x2x128xbf16, #tpu.memory_space<vmem>>, vector<1x2x128xbf16>
    %407 = vector.shape_cast %406 : vector<1x2x128xbf16> to vector<2x128xbf16>
    %408 = vector.shape_cast %404 : vector<2x128xbf16> to vector<1x2x128xbf16>
    tpu.vector_store %arg6[%405, %c0_102, %c0_103], %408 {strides = array<i32>} : memref<8x2x128xbf16, #tpu.memory_space<vmem>>, vector<1x2x128xbf16>,
    %c8_i32 = arith.constant 8 : i32
    %c0_104 = arith.constant 0 : index
    %c0_105 = arith.constant 0 : index
    %409 = vector.load %arg7[%c0_104, %c0_105] : memref<2x128xf32, #tpu.memory_space<vmem>>, vector<2x128xf32>
    tpu.vector_store %arg7[%c0_104, %c0_105], %403 {strides = array<i32>} : memref<2x128xf32, #tpu.memory_space<vmem>>, vector<2x128xf32>,
    %c0_i32_106 = arith.constant 0 : i32
    %410 = arith.index_cast %c0_i32_106 : i32 to index
    %c0_107 = arith.constant 0 : index
    %c0_108 = arith.constant 0 : index
    %411 = vector.load %arg6[%410, %c0_107, %c0_108] : memref<8x2x128xbf16, #tpu.memory_space<vmem>>, vector<1x2x128xbf16>
    %412 = vector.shape_cast %411 : vector<1x2x128xbf16> to vector<2x128xbf16>
    %413 = arith.extf %412 : vector<2x128xbf16> to vector<2x128xf32>
    %c7_i32_109 = arith.constant 7 : i32
    %414 = arith.subi %c7_i32_109, %c0_i32_106 : i32
    %415 = arith.index_cast %414 : i32 to index
    %c0_110 = arith.constant 0 : index
    %c0_111 = arith.constant 0 : index
    %416 = vector.load %arg6[%415, %c0_110, %c0_111] : memref<8x2x128xbf16, #tpu.memory_space<vmem>>, vector<1x2x128xbf16>
    %417 = vector.shape_cast %416 : vector<1x2x128xbf16> to vector<2x128xbf16>
    %418 = arith.extf %417 : vector<2x128xbf16> to vector<2x128xf32>
    %419 = vector.broadcast %13 : vector<1x128xf32> to vector<2x128xf32>
    %420 = arith.mulf %419, %413 : vector<2x128xf32>
    %421 = vector.broadcast %15 : vector<1x128xf32> to vector<2x128xf32>
    %422 = arith.mulf %421, %418 : vector<2x128xf32>
    %423 = arith.addf %420, %422 : vector<2x128xf32>
    %424 = arith.truncf %423 : vector<2x128xf32> to vector<2x128xbf16>
    %425 = arith.index_cast %c0_i32_106 : i32 to index
    %c0_112 = arith.constant 0 : index
    %c0_113 = arith.constant 0 : index
    %426 = vector.load %arg6[%425, %c0_112, %c0_113] : memref<8x2x128xbf16, #tpu.memory_space<vmem>>, vector<1x2x128xbf16>
    %427 = vector.shape_cast %426 : vector<1x2x128xbf16> to vector<2x128xbf16>
    %428 = vector.shape_cast %424 : vector<2x128xbf16> to vector<1x2x128xbf16>
    tpu.vector_store %arg6[%425, %c0_112, %c0_113], %428 {strides = array<i32>} : memref<8x2x128xbf16, #tpu.memory_space<vmem>>, vector<1x2x128xbf16>,
    %429 = vector.broadcast %13 : vector<1x128xf32> to vector<2x128xf32>
    %430 = arith.mulf %429, %418 : vector<2x128xf32>
    %431 = vector.broadcast %15 : vector<1x128xf32> to vector<2x128xf32>
    %432 = arith.mulf %431, %413 : vector<2x128xf32>
    %433 = arith.addf %430, %432 : vector<2x128xf32>
    %434 = arith.truncf %433 : vector<2x128xf32> to vector<2x128xbf16>
    %c7_i32_114 = arith.constant 7 : i32
    %435 = arith.subi %c7_i32_114, %c0_i32_106 : i32
    %436 = arith.index_cast %435 : i32 to index
    %c0_115 = arith.constant 0 : index
    %c0_116 = arith.constant 0 : index
    %437 = vector.load %arg6[%436, %c0_115, %c0_116] : memref<8x2x128xbf16, #tpu.memory_space<vmem>>, vector<1x2x128xbf16>
    %438 = vector.shape_cast %437 : vector<1x2x128xbf16> to vector<2x128xbf16>
    %439 = vector.shape_cast %434 : vector<2x128xbf16> to vector<1x2x128xbf16>
    tpu.vector_store %arg6[%436, %c0_115, %c0_116], %439 {strides = array<i32>} : memref<8x2x128xbf16, #tpu.memory_space<vmem>>, vector<1x2x128xbf16>,
    %c1_i32_117 = arith.constant 1 : i32
    %440 = arith.index_cast %c1_i32_117 : i32 to index
    %c0_118 = arith.constant 0 : index
    %c0_119 = arith.constant 0 : index
    %441 = vector.load %arg6[%440, %c0_118, %c0_119] : memref<8x2x128xbf16, #tpu.memory_space<vmem>>, vector<1x2x128xbf16>
    %442 = vector.shape_cast %441 : vector<1x2x128xbf16> to vector<2x128xbf16>
    %443 = arith.extf %442 : vector<2x128xbf16> to vector<2x128xf32>
    %c7_i32_120 = arith.constant 7 : i32
    %444 = arith.subi %c7_i32_120, %c1_i32_117 : i32
    %445 = arith.index_cast %444 : i32 to index
    %c0_121 = arith.constant 0 : index
    %c0_122 = arith.constant 0 : index
    %446 = vector.load %arg6[%445, %c0_121, %c0_122] : memref<8x2x128xbf16, #tpu.memory_space<vmem>>, vector<1x2x128xbf16>
    %447 = vector.shape_cast %446 : vector<1x2x128xbf16> to vector<2x128xbf16>
    %448 = arith.extf %447 : vector<2x128xbf16> to vector<2x128xf32>
    %449 = vector.broadcast %13 : vector<1x128xf32> to vector<2x128xf32>
    %450 = arith.mulf %449, %443 : vector<2x128xf32>
    %451 = vector.broadcast %15 : vector<1x128xf32> to vector<2x128xf32>
    %452 = arith.mulf %451, %448 : vector<2x128xf32>
    %453 = arith.addf %450, %452 : vector<2x128xf32>
    %454 = arith.truncf %453 : vector<2x128xf32> to vector<2x128xbf16>
    %455 = arith.index_cast %c1_i32_117 : i32 to index
    %c0_123 = arith.constant 0 : index
    %c0_124 = arith.constant 0 : index
    %456 = vector.load %arg6[%455, %c0_123, %c0_124] : memref<8x2x128xbf16, #tpu.memory_space<vmem>>, vector<1x2x128xbf16>
    %457 = vector.shape_cast %456 : vector<1x2x128xbf16> to vector<2x128xbf16>
    %458 = vector.shape_cast %454 : vector<2x128xbf16> to vector<1x2x128xbf16>
    tpu.vector_store %arg6[%455, %c0_123, %c0_124], %458 {strides = array<i32>} : memref<8x2x128xbf16, #tpu.memory_space<vmem>>, vector<1x2x128xbf16>,
    %459 = vector.broadcast %13 : vector<1x128xf32> to vector<2x128xf32>
    %460 = arith.mulf %459, %448 : vector<2x128xf32>
    %461 = vector.broadcast %15 : vector<1x128xf32> to vector<2x128xf32>
    %462 = arith.mulf %461, %443 : vector<2x128xf32>
    %463 = arith.addf %460, %462 : vector<2x128xf32>
    %464 = arith.truncf %463 : vector<2x128xf32> to vector<2x128xbf16>
    %c7_i32_125 = arith.constant 7 : i32
    %465 = arith.subi %c7_i32_125, %c1_i32_117 : i32
    %466 = arith.index_cast %465 : i32 to index
    %c0_126 = arith.constant 0 : index
    %c0_127 = arith.constant 0 : index
    %467 = vector.load %arg6[%466, %c0_126, %c0_127] : memref<8x2x128xbf16, #tpu.memory_space<vmem>>, vector<1x2x128xbf16>
    %468 = vector.shape_cast %467 : vector<1x2x128xbf16> to vector<2x128xbf16>
    %469 = vector.shape_cast %464 : vector<2x128xbf16> to vector<1x2x128xbf16>
    tpu.vector_store %arg6[%466, %c0_126, %c0_127], %469 {strides = array<i32>} : memref<8x2x128xbf16, #tpu.memory_space<vmem>>, vector<1x2x128xbf16>,
    %c2_i32_128 = arith.constant 2 : i32
    %470 = arith.index_cast %c2_i32_128 : i32 to index
    %c0_129 = arith.constant 0 : index
    %c0_130 = arith.constant 0 : index
    %471 = vector.load %arg6[%470, %c0_129, %c0_130] : memref<8x2x128xbf16, #tpu.memory_space<vmem>>, vector<1x2x128xbf16>
    %472 = vector.shape_cast %471 : vector<1x2x128xbf16> to vector<2x128xbf16>
    %473 = arith.extf %472 : vector<2x128xbf16> to vector<2x128xf32>
    %c7_i32_131 = arith.constant 7 : i32
    %474 = arith.subi %c7_i32_131, %c2_i32_128 : i32
    %475 = arith.index_cast %474 : i32 to index
    %c0_132 = arith.constant 0 : index
    %c0_133 = arith.constant 0 : index
    %476 = vector.load %arg6[%475, %c0_132, %c0_133] : memref<8x2x128xbf16, #tpu.memory_space<vmem>>, vector<1x2x128xbf16>
    %477 = vector.shape_cast %476 : vector<1x2x128xbf16> to vector<2x128xbf16>
    %478 = arith.extf %477 : vector<2x128xbf16> to vector<2x128xf32>
    %479 = vector.broadcast %13 : vector<1x128xf32> to vector<2x128xf32>
    %480 = arith.mulf %479, %473 : vector<2x128xf32>
    %481 = vector.broadcast %15 : vector<1x128xf32> to vector<2x128xf32>
    %482 = arith.mulf %481, %478 : vector<2x128xf32>
    %483 = arith.addf %480, %482 : vector<2x128xf32>
    %484 = arith.truncf %483 : vector<2x128xf32> to vector<2x128xbf16>
    %485 = arith.index_cast %c2_i32_128 : i32 to index
    %c0_134 = arith.constant 0 : index
    %c0_135 = arith.constant 0 : index
    %486 = vector.load %arg6[%485, %c0_134, %c0_135] : memref<8x2x128xbf16, #tpu.memory_space<vmem>>, vector<1x2x128xbf16>
    %487 = vector.shape_cast %486 : vector<1x2x128xbf16> to vector<2x128xbf16>
    %488 = vector.shape_cast %484 : vector<2x128xbf16> to vector<1x2x128xbf16>
    tpu.vector_store %arg6[%485, %c0_134, %c0_135], %488 {strides = array<i32>} : memref<8x2x128xbf16, #tpu.memory_space<vmem>>, vector<1x2x128xbf16>,
    %489 = vector.broadcast %13 : vector<1x128xf32> to vector<2x128xf32>
    %490 = arith.mulf %489, %478 : vector<2x128xf32>
    %491 = vector.broadcast %15 : vector<1x128xf32> to vector<2x128xf32>
    %492 = arith.mulf %491, %473 : vector<2x128xf32>
    %493 = arith.addf %490, %492 : vector<2x128xf32>
    %494 = arith.truncf %493 : vector<2x128xf32> to vector<2x128xbf16>
    %c7_i32_136 = arith.constant 7 : i32
    %495 = arith.subi %c7_i32_136, %c2_i32_128 : i32
    %496 = arith.index_cast %495 : i32 to index
    %c0_137 = arith.constant 0 : index
    %c0_138 = arith.constant 0 : index
    %497 = vector.load %arg6[%496, %c0_137, %c0_138] : memref<8x2x128xbf16, #tpu.memory_space<vmem>>, vector<1x2x128xbf16>
    %498 = vector.shape_cast %497 : vector<1x2x128xbf16> to vector<2x128xbf16>
    %499 = vector.shape_cast %494 : vector<2x128xbf16> to vector<1x2x128xbf16>
    tpu.vector_store %arg6[%496, %c0_137, %c0_138], %499 {strides = array<i32>} : memref<8x2x128xbf16, #tpu.memory_space<vmem>>, vector<1x2x128xbf16>,
    %c3_i32_139 = arith.constant 3 : i32
    %500 = arith.index_cast %c3_i32_139 : i32 to index
    %c0_140 = arith.constant 0 : index
    %c0_141 = arith.constant 0 : index
    %501 = vector.load %arg6[%500, %c0_140, %c0_141] : memref<8x2x128xbf16, #tpu.memory_space<vmem>>, vector<1x2x128xbf16>
    %502 = vector.shape_cast %501 : vector<1x2x128xbf16> to vector<2x128xbf16>
    %503 = arith.extf %502 : vector<2x128xbf16> to vector<2x128xf32>
    %c7_i32_142 = arith.constant 7 : i32
    %504 = arith.subi %c7_i32_142, %c3_i32_139 : i32
    %505 = arith.index_cast %504 : i32 to index
    %c0_143 = arith.constant 0 : index
    %c0_144 = arith.constant 0 : index
    %506 = vector.load %arg6[%505, %c0_143, %c0_144] : memref<8x2x128xbf16, #tpu.memory_space<vmem>>, vector<1x2x128xbf16>
    %507 = vector.shape_cast %506 : vector<1x2x128xbf16> to vector<2x128xbf16>
    %508 = arith.extf %507 : vector<2x128xbf16> to vector<2x128xf32>
    %509 = vector.broadcast %13 : vector<1x128xf32> to vector<2x128xf32>
    %510 = arith.mulf %509, %503 : vector<2x128xf32>
    %511 = vector.broadcast %15 : vector<1x128xf32> to vector<2x128xf32>
    %512 = arith.mulf %511, %508 : vector<2x128xf32>
    %513 = arith.addf %510, %512 : vector<2x128xf32>
    %514 = arith.truncf %513 : vector<2x128xf32> to vector<2x128xbf16>
    %515 = arith.index_cast %c3_i32_139 : i32 to index
    %c0_145 = arith.constant 0 : index
    %c0_146 = arith.constant 0 : index
    %516 = vector.load %arg6[%515, %c0_145, %c0_146] : memref<8x2x128xbf16, #tpu.memory_space<vmem>>, vector<1x2x128xbf16>
    %517 = vector.shape_cast %516 : vector<1x2x128xbf16> to vector<2x128xbf16>
    %518 = vector.shape_cast %514 : vector<2x128xbf16> to vector<1x2x128xbf16>
    tpu.vector_store %arg6[%515, %c0_145, %c0_146], %518 {strides = array<i32>} : memref<8x2x128xbf16, #tpu.memory_space<vmem>>, vector<1x2x128xbf16>,
    %519 = vector.broadcast %13 : vector<1x128xf32> to vector<2x128xf32>
    %520 = arith.mulf %519, %508 : vector<2x128xf32>
    %521 = vector.broadcast %15 : vector<1x128xf32> to vector<2x128xf32>
    %522 = arith.mulf %521, %503 : vector<2x128xf32>
    %523 = arith.addf %520, %522 : vector<2x128xf32>
    %524 = arith.truncf %523 : vector<2x128xf32> to vector<2x128xbf16>
    %c7_i32_147 = arith.constant 7 : i32
    %525 = arith.subi %c7_i32_147, %c3_i32_139 : i32
    %526 = arith.index_cast %525 : i32 to index
    %c0_148 = arith.constant 0 : index
    %c0_149 = arith.constant 0 : index
    %527 = vector.load %arg6[%526, %c0_148, %c0_149] : memref<8x2x128xbf16, #tpu.memory_space<vmem>>, vector<1x2x128xbf16>
    %528 = vector.shape_cast %527 : vector<1x2x128xbf16> to vector<2x128xbf16>
    %529 = vector.shape_cast %524 : vector<2x128xbf16> to vector<1x2x128xbf16>
    tpu.vector_store %arg6[%526, %c0_148, %c0_149], %529 {strides = array<i32>} : memref<8x2x128xbf16, #tpu.memory_space<vmem>>, vector<1x2x128xbf16>,
    %c4_i32_150 = arith.constant 4 : i32
    return
  }
}

</mosaic_0001>

<llo_original>
// kernel: tpu_custom_call.1
$region0: #{tpu_custom_call.1}
  #allocation0 [shape = 'u32[]', space=smem, size = 0x4, offset = 0x4, fixed_abs, tag = 'smem constant byte address 0x4 - core index']
  #allocation1 [shape = 'u32[72,128]{1,0:T(1,128)}', space=vmem, size = 0x9000, scoped, tag = 'internal scratch']
  #allocation2 [shape = 'bf16[16,384]{1,0:T(8,128)(2,1)}', space=vmem, size = 0x3000, scoped, tag = 'scratch operand']
  %s0 = inlined_call_operand.hbm [shape: bf16[16,16], index: 0, kind: input, shape index: {}]
  %s1 = inlined_call_operand.hbm [shape: bf16[16,384], index: 1, kind: input, shape index: {}]
  %s2 = inlined_call_operand.hbm [shape: f32[1,384], index: 2, kind: input, shape index: {}]
  %s3 = inlined_call_operand.hbm [shape: bf16[128,384], index: 3, kind: input, shape index: {}]
  %s4 = inlined_call_operand.vmem [shape: f32[1,384], index: 4, kind: input, shape index: {}]
  %s5 = inlined_call_operand.hbm [shape: f32[1,384], index: 5, kind: input, shape index: {}]
  %s6 = inlined_call_operand.hbm [shape: bf16[8,2,128], index: 6, kind: output, shape index: {0}]
  %s7 = inlined_call_operand.hbm [shape: f32[2,128], index: 7, kind: output, shape index: {1}]
  %8 = xla_tuple %s6, %s7
  %s9 = sld [smem:[#allocation0]]
  $region62: #{tpu_custom_call.1} parent=0
    _
  %s11 = ssub.s32 1, %s9
  %s12 = scalar_select 0, %s11, %s9
  $region1: #{tpu_custom_call.1} parent=0
    #allocation3 [shape = 'u8[4096]{0}', space=vmem, size = 0x1000, scoped, tag = 'input window, operand 0, single buffered']
    #allocation4 [shape = 's32[1]{0}', space=sflag, size = 0x4, scoped, tag = 'scoped memory for tpu_custom_call.1']
    #allocation5 [shape = 's32[1]{0}', space=sflag, size = 0x4, scoped, tag = 'scoped memory for tpu_custom_call.1']
    #allocation6 [shape = 'u8[12288]{0}', space=vmem, size = 0x3000, scoped, tag = 'input window, operand 1, single buffered']
    #allocation7 [shape = 's32[1]{0}', space=sflag, size = 0x4, scoped, tag = 'scoped memory for tpu_custom_call.1']
    #allocation8 [shape = 'u8[1536]{0}', space=vmem, size = 0x800, scoped, tag = 'input window, operand 2, single buffered']
    #allocation9 [shape = 'u8[98304]{0}', space=vmem, size = 0x18000, scoped, tag = 'input window, operand 3, single buffered']
    #allocation10 [shape = 's32[1]{0}', space=sflag, size = 0x4, scoped, tag = 'scoped memory for tpu_custom_call.1']
    #allocation11 [shape = 'u8[1536]{0}', space=vmem, size = 0x800, scoped, tag = 'input window, operand 5, single buffered']
    #allocation12 [shape = 'u8[4096]{0}', space=vmem, size = 0x1000, scoped, tag = 'output window, operand 0, single buffered']
    #allocation13 [shape = 'u8[1024]{0}', space=vmem, size = 0x400, scoped, tag = 'output window, operand 1, single buffered']
    #allocation14 [shape = 's32[1]{0}', space=sflag, size = 0x4, scoped, tag = 'scoped memory for tpu_custom_call.1']
    %13 = vsyncpa [#allocation4], 0
    %14 = vsyncpa [#allocation7], 0
    %15 = vsyncpa [#allocation10], 0
    %16 = vsyncpa [#allocation5], 0
    %17 = vsyncpa [#allocation14], 0
    // Predicated region
    $region2: #{tpu_custom_call.1} parent=1 // pred_check
      _
    $region3: #{tpu_custom_call.1} parent=1 // pred_check_branch
      %19 = sbr.rel (0) target = $region5
    $region4: #{tpu_custom_call.1} parent=1 // pred_region
      %21 = vsyncadd [#allocation4], 0
      %s22 = sshll.u32 %s0, 4
      %s23 = int_to_ptr.hbm [resolvable:$true] %s22
      %s24 = sshll.u32 [#allocation3], 4
      %s25 = int_to_ptr.vmem [resolvable:$true] %s24
      %30 = dma.hbm_to_vmem [thread:$0]  %s23, 128, %s25, [#allocation4], 64, 64, 4
    $region5: #{tpu_custom_call.1} parent=1 // pred_fallthru
      _
    // Predicated region
    $region6: #{tpu_custom_call.1} parent=1 // pred_check
      _
    $region7: #{tpu_custom_call.1} parent=1 // pred_check_branch
      %32 = sbr.rel (0) target = $region9
    $region8: #{tpu_custom_call.1} parent=1 // pred_region
      %34 = vsyncadd [#allocation7], 0
      %s35 = sshll.u32 %s1, 4
      %s36 = int_to_ptr.hbm [resolvable:$true] %s35
      %s37 = sshll.u32 [#allocation6], 4
      %s38 = int_to_ptr.vmem [resolvable:$true] %s37
      %43 = dma.hbm_to_vmem [thread:$0]  %s36, 384, %s38, [#allocation7], 192, 192, 12
    $region9: #{tpu_custom_call.1} parent=1 // pred_fallthru
      _
    // Predicated region
    $region10: #{tpu_custom_call.1} parent=1 // pred_check
      _
    $region11: #{tpu_custom_call.1} parent=1 // pred_check_branch
      %45 = sbr.rel (0) target = $region13
    $region12: #{tpu_custom_call.1} parent=1 // pred_region
      %47 = vsyncadd [#allocation7], 0
      %s49 = sshll.u32 %s2, 4
      %s50 = int_to_ptr.hbm [resolvable:$true] %s49
      %s51 = sshll.u32 [#allocation8], 4
      %s52 = int_to_ptr.vmem [resolvable:$true] %s51
      %54 = dma.hbm_to_vmem [thread:$0]  %s50, 48, %s52, [#allocation7]
    $region13: #{tpu_custom_call.1} parent=1 // pred_fallthru
      _
    // Predicated region
    $region14: #{tpu_custom_call.1} parent=1 // pred_check
      _
    $region15: #{tpu_custom_call.1} parent=1 // pred_check_branch
      %56 = sbr.rel (0) target = $region17
    $region16: #{tpu_custom_call.1} parent=1 // pred_region
      %58 = vsyncadd [#allocation10], 0
      %s59 = sshll.u32 %s3, 4
      %s60 = int_to_ptr.hbm [resolvable:$true] %s59
      %s61 = sshll.u32 [#allocation9], 4
      %s62 = int_to_ptr.vmem [resolvable:$true] %s61
      %67 = dma.hbm_to_vmem [thread:$0]  %s60, 3072, %s62, [#allocation10], 192, 192, 12
    $region17: #{tpu_custom_call.1} parent=1 // pred_fallthru
      _
    // Predicated region
    $region18: #{tpu_custom_call.1} parent=1 // pred_check
      _
    $region19: #{tpu_custom_call.1} parent=1 // pred_check_branch
      %69 = sbr.rel (0) target = $region21
    $region20: #{tpu_custom_call.1} parent=1 // pred_region
      _
    $region21: #{tpu_custom_call.1} parent=1 // pred_fallthru
      _
    // Predicated region
    $region22: #{tpu_custom_call.1} parent=1 // pred_check
      _
    $region23: #{tpu_custom_call.1} parent=1 // pred_check_branch
      %71 = sbr.rel (0) target = $region25
    $region24: #{tpu_custom_call.1} parent=1 // pred_region
      %73 = vsyncadd [#allocation10], 0
      %s75 = sshll.u32 %s5, 4
      %s76 = int_to_ptr.hbm [resolvable:$true] %s75
      %s77 = sshll.u32 [#allocation11], 4
      %s78 = int_to_ptr.vmem [resolvable:$true] %s77
      %80 = dma.hbm_to_vmem [thread:$0]  %s76, 48, %s78, [#allocation10]
    $region25: #{tpu_custom_call.1} parent=1 // pred_fallthru
      _
    // Predicated region
    $region26: #{tpu_custom_call.1} parent=1 // pred_check
      _
    $region27: #{tpu_custom_call.1} parent=1 // pred_check_branch
      %82 = sbr.rel (0) target = $region29
    $region28: #{tpu_custom_call.1} parent=1 // pred_region
      %84 = dma.done [#allocation4], 128
    $region29: #{tpu_custom_call.1} parent=1 // pred_fallthru
      _
    // Predicated region
    $region30: #{tpu_custom_call.1} parent=1 // pred_check
      _
    $region31: #{tpu_custom_call.1} parent=1 // pred_check_branch
      %86 = sbr.rel (0) target = $region33
    $region32: #{tpu_custom_call.1} parent=1 // pred_region
      %88 = dma.done [#allocation7], 384
    $region33: #{tpu_custom_call.1} parent=1 // pred_fallthru
      _
    // Predicated region
    $region34: #{tpu_custom_call.1} parent=1 // pred_check
      _
    $region35: #{tpu_custom_call.1} parent=1 // pred_check_branch
      %90 = sbr.rel (0) target = $region37
    $region36: #{tpu_custom_call.1} parent=1 // pred_region
      %92 = dma.done [#allocation7], 48
    $region37: #{tpu_custom_call.1} parent=1 // pred_fallthru
      _
    // Predicated region
    $region38: #{tpu_custom_call.1} parent=1 // pred_check
      _
    $region39: #{tpu_custom_call.1} parent=1 // pred_check_branch
      %94 = sbr.rel (0) target = $region41
    $region40: #{tpu_custom_call.1} parent=1 // pred_region
      %96 = dma.done [#allocation10], 3072
    $region41: #{tpu_custom_call.1} parent=1 // pred_fallthru
      _
    // Predicated region
    $region42: #{tpu_custom_call.1} parent=1 // pred_check
      _
    $region43: #{tpu_custom_call.1} parent=1 // pred_check_branch
      %98 = sbr.rel (0) target = $region45
    $region44: #{tpu_custom_call.1} parent=1 // pred_region
      %100 = dma.done [#allocation10], 48
    $region45: #{tpu_custom_call.1} parent=1 // pred_fallthru
      _
    %v102 = vld [vmem:[#allocation3] sm:$0xf]
    %v103 = vld [vmem:[#allocation3 + $0x4] sm:$0xf]
    %v104 = vld [vmem:[#allocation6] sm:$0xff]
    %v105 = vld [vmem:[#allocation6 + $0x8] sm:$0xf]
    %v106 = vld [vmem:[#allocation6 + $0xc] sm:$0xff]
    %v107 = vld [vmem:[#allocation6 + $0x14] sm:$0xf]
    %v108 = vld [vmem:[#allocation8] sm:$0x7]
    %v110 = vperm.slane %v108, 0
    %v111 = vperm.slane %v108, 1
    %v112 = vperm.slane %v108, 2
    %v118 = vunpack.c.l.b16 %v102
    %v119 = vunpack.c.l.b16 %v103
    %v120 = vpack.c.b16 %v119, %v118
    %v125 = vunpack.c.l.b16 %v104
    %v126 = vunpack.c.h.b16 %v104
    %v127 = vunpack.c.l.b16 %v105
    %v128 = vunpack.c.l.b16 %v106
    %v129 = vunpack.c.h.b16 %v106
    %v130 = vunpack.c.l.b16 %v107
    %v131 = vpack.c.b16 %v128, %v125
    %v132 = vpack.c.b16 %v129, %v126
    %v133 = vpack.c.b16 %v130, %v127
    %vm137 = vcmask 130048
    %v139 = vsel %vm137, %v120, 0
    %141 = vmatpush.bf16.msra.mxu0 0
    %142 = vmatpush.bf16.msra.mxu0 0
    %143 = vmatpush.bf16.msra.mxu0 0
    %144 = vmatpush.bf16.msra.mxu0 0
    %145 = vmatpush.bf16.msra.mxu0 0
    %146 = vmatpush.bf16.msra.mxu0 0
    %147 = vmatpush.bf16.msra.mxu0 0
    %148 = vmatpush.bf16.msra.mxu0 %v131
    %149 = vmatmul.bf16.gmra.mxu0 %v139
    %v150 = vpop.f32.mrf.mxu0
    %v151 = vadd.f32 %v110, %v150
    %v152 = vpop.f32.mrf.mxu0
    %v153 = vadd.f32 %v110, %v152
    %154 = vdwg.mxu0
    %155 = vmatpush.bf16.msra.mxu0 0
    %156 = vmatpush.bf16.msra.mxu0 0
    %157 = vmatpush.bf16.msra.mxu0 0
    %158 = vmatpush.bf16.msra.mxu0 0
    %159 = vmatpush.bf16.msra.mxu0 0
    %160 = vmatpush.bf16.msra.mxu0 0
    %161 = vmatpush.bf16.msra.mxu0 0
    %162 = vmatpush.bf16.msra.mxu0 %v132
    %163 = vmatmul.bf16.gmra.mxu0 %v139
    %v164 = vpop.f32.mrf.mxu0
    %v165 = vadd.f32 %v111, %v164
    %v166 = vpop.f32.mrf.mxu0
    %v167 = vadd.f32 %v111, %v166
    %168 = vdwg.mxu0
    %169 = vmatpush.bf16.msra.mxu0 0
    %170 = vmatpush.bf16.msra.mxu0 0
    %171 = vmatpush.bf16.msra.mxu0 0
    %172 = vmatpush.bf16.msra.mxu0 0
    %173 = vmatpush.bf16.msra.mxu0 0
    %174 = vmatpush.bf16.msra.mxu0 0
    %175 = vmatpush.bf16.msra.mxu0 0
    %176 = vmatpush.bf16.msra.mxu0 %v133
    %177 = vmatmul.bf16.gmra.mxu0 %v139
    %v178 = vpop.f32.mrf.mxu0
    %v179 = vadd.f32 %v112, %v178
    %v180 = vpop.f32.mrf.mxu0
    %v181 = vadd.f32 %v112, %v180
    %182 = vdwg.mxu0
    %v183 = vpack.c.bf16 %v165, %v151
    %v184 = vpack.c.bf16 %v179, %v179
    %v185 = vpack.c.bf16 %v167, %v153
    %v186 = vpack.c.bf16 %v181, %v181
    %187 = vst [vmem:[#allocation2] sm:$0xff] %v183
    %188 = vst [vmem:[#allocation2 + $0x8] sm:$0xf] %v184
    %189 = vst [vmem:[#allocation2 + $0xc] sm:$0xff] %v185
    %190 = vst [vmem:[#allocation2 + $0x14] sm:$0xf] %v186
    %v191 = vld [vmem:[#allocation9] sm:$0xff]
    %v192 = vld [vmem:[#allocation9 + $0x8] sm:$0xf]
    %v193 = vld [vmem:[#allocation9 + $0xc] sm:$0xff]
    %v194 = vld [vmem:[#allocation9 + $0x14] sm:$0xf]
    %v195 = vld [vmem:[#allocation9 + $0x18] sm:$0xff]
    %v196 = vld [vmem:[#allocation9 + $0x20] sm:$0xf]
    %v197 = vld [vmem:[#allocation9 + $0x24] sm:$0xff]
    %v198 = vld [vmem:[#allocation9 + $0x2c] sm:$0xf]
    %v199 = vld [vmem:[#allocation9 + $0x30] sm:$0xff]
    %v200 = vld [vmem:[#allocation9 + $0x38] sm:$0xf]
    %v201 = vld [vmem:[#allocation9 + $0x3c] sm:$0xff]
    %v202 = vld [vmem:[#allocation9 + $0x44] sm:$0xf]
    %v203 = vld [vmem:[#allocation9 + $0x48] sm:$0xff]
    %v204 = vld [vmem:[#allocation9 + $0x50] sm:$0xf]
    %v205 = vld [vmem:[#allocation9 + $0x54] sm:$0xff]
    %v206 = vld [vmem:[#allocation9 + $0x5c] sm:$0xf]
    %v207 = vld [vmem:[#allocation9 + $0x60] sm:$0xff]
    %v208 = vld [vmem:[#allocation9 + $0x68] sm:$0xf]
    %v209 = vld [vmem:[#allocation9 + $0x6c] sm:$0xff]
    %v210 = vld [vmem:[#allocation9 + $0x74] sm:$0xf]
    %v211 = vld [vmem:[#allocation9 + $0x78] sm:$0xff]
    %v212 = vld [vmem:[#allocation9 + $0x80] sm:$0xf]
    %v213 = vld [vmem:[#allocation9 + $0x84] sm:$0xff]
    %v214 = vld [vmem:[#allocation9 + $0x8c] sm:$0xf]
    %v215 = vld [vmem:[#allocation9 + $0x90] sm:$0xff]
    %v216 = vld [vmem:[#allocation9 + $0x98] sm:$0xf]
    %v217 = vld [vmem:[#allocation9 + $0x9c] sm:$0xff]
    %v218 = vld [vmem:[#allocation9 + $0xa4] sm:$0xf]
    %v219 = vld [vmem:[#allocation9 + $0xa8] sm:$0xff]
    %v220 = vld [vmem:[#allocation9 + $0xb0] sm:$0xf]
    %v221 = vld [vmem:[#allocation9 + $0xb4] sm:$0xff]
    %v222 = vld [vmem:[#allocation9 + $0xbc] sm:$0xf]
    %v223 = vld [vmem:[%s4] sm:$0x7]
    %v224 = vld [vmem:[#allocation11] sm:$0x7]
    %v225 = vsub.f32 1.0, %v224
    %v226 = vld [vmem:[#allocation2] sm:$0x11]
    %v227 = vld [vmem:[#allocation2 + $0x8] sm:$0x1]
    %v228 = vunpack.c.l.bf16 %v226
    %v229 = vunpack.c.h.bf16 %v226
    %v230 = vunpack.c.l.bf16 %v227
    %v231 = vld [vmem:[#allocation2 + $0xc] sm:$0x88]
    %v232 = vld [vmem:[#allocation2 + $0x14] sm:$0x8]
    %v233 = vunpack.c.l.bf16 %v231
    %v234 = vunpack.c.h.bf16 %v231
    %v235 = vunpack.c.l.bf16 %v232
    %v237 = vperm.slane %v224, 0
    %v238 = vperm.slane %v224, 1
    %v239 = vperm.slane %v224, 2
    %v243 = vmul.f32 %v237, %v228
    %v244 = vmul.f32 %v238, %v229
    %v245 = vmul.f32 %v239, %v230
    %v247 = vperm.slane %v225, 0
    %v248 = vperm.slane %v225, 1
    %v249 = vperm.slane %v225, 2
    %v253 = vmul.f32 %v247, %v233
    %v254 = vmul.f32 %v248, %v234
    %v255 = vmul.f32 %v249, %v235
    %v259 = vrot.slane %v253, 6
    %v260 = vrot.slane %v254, 6
    %v261 = vrot.slane %v255, 6
    %v265 = vadd.f32 %v243, %v259
    %v266 = vadd.f32 %v244, %v260
    %v267 = vadd.f32 %v245, %v261
    %v269 = vperm.slane %v223, 0
    %v270 = vperm.slane %v223, 1
    %v271 = vperm.slane %v223, 2
    %v307 = vunpack.c.l.b16 %v191
    %v308 = vunpack.c.h.b16 %v191
    %v309 = vunpack.c.l.b16 %v192
    %v310 = vunpack.c.l.b16 %v193
    %v311 = vunpack.c.h.b16 %v193
    %v312 = vunpack.c.l.b16 %v194
    %v313 = vunpack.c.l.b16 %v195
    %v314 = vunpack.c.h.b16 %v195
    %v315 = vunpack.c.l.b16 %v196
    %v316 = vunpack.c.l.b16 %v197
    %v317 = vunpack.c.h.b16 %v197
    %v318 = vunpack.c.l.b16 %v198
    %v319 = vunpack.c.l.b16 %v199
    %v320 = vunpack.c.h.b16 %v199
    %v321 = vunpack.c.l.b16 %v200
    %v322 = vunpack.c.l.b16 %v201
    %v323 = vunpack.c.h.b16 %v201
    %v324 = vunpack.c.l.b16 %v202
    %v325 = vunpack.c.l.b16 %v203
    %v326 = vunpack.c.h.b16 %v203
    %v327 = vunpack.c.l.b16 %v204
    %v328 = vunpack.c.l.b16 %v205
    %v329 = vunpack.c.h.b16 %v205
    %v330 = vunpack.c.l.b16 %v206
    %v331 = vunpack.c.l.b16 %v207
    %v332 = vunpack.c.h.b16 %v207
    %v333 = vunpack.c.l.b16 %v208
    %v334 = vunpack.c.l.b16 %v209
    %v335 = vunpack.c.h.b16 %v209
    %v336 = vunpack.c.l.b16 %v210
    %v337 = vunpack.c.l.b16 %v211
    %v338 = vunpack.c.h.b16 %v211
    %v339 = vunpack.c.l.b16 %v212
    %v340 = vunpack.c.l.b16 %v213
    %v341 = vunpack.c.h.b16 %v213
    %v342 = vunpack.c.l.b16 %v214
    %v343 = vunpack.c.l.b16 %v215
    %v344 = vunpack.c.h.b16 %v215
    %v345 = vunpack.c.l.b16 %v216
    %v346 = vunpack.c.l.b16 %v217
    %v347 = vunpack.c.h.b16 %v217
    %v348 = vunpack.c.l.b16 %v218
    %v349 = vunpack.c.l.b16 %v219
    %v350 = vunpack.c.h.b16 %v219
    %v351 = vunpack.c.l.b16 %v220
    %v352 = vunpack.c.l.b16 %v221
    %v353 = vunpack.c.h.b16 %v221
    %v354 = vunpack.c.l.b16 %v222
    %v355 = vpack.c.b16 %v310, %v307
    %v356 = vpack.c.b16 %v311, %v308
    %v357 = vpack.c.b16 %v312, %v309
    %v358 = vpack.c.b16 %v316, %v313
    %v359 = vpack.c.b16 %v317, %v314
    %v360 = vpack.c.b16 %v318, %v315
    %v361 = vpack.c.b16 %v322, %v319
    %v362 = vpack.c.b16 %v323, %v320
    %v363 = vpack.c.b16 %v324, %v321
    %v364 = vpack.c.b16 %v328, %v325
    %v365 = vpack.c.b16 %v329, %v326
    %v366 = vpack.c.b16 %v330, %v327
    %v367 = vpack.c.b16 %v334, %v331
    %v368 = vpack.c.b16 %v335, %v332
    %v369 = vpack.c.b16 %v336, %v333
    %v370 = vpack.c.b16 %v340, %v337
    %v371 = vpack.c.b16 %v341, %v338
    %v372 = vpack.c.b16 %v342, %v339
    %v373 = vpack.c.b16 %v346, %v343
    %v374 = vpack.c.b16 %v347, %v344
    %v375 = vpack.c.b16 %v348, %v345
    %v376 = vpack.c.b16 %v352, %v349
    %v377 = vpack.c.b16 %v353, %v350
    %v378 = vpack.c.b16 %v354, %v351
    %403 = vmatpush.bf16.msra.mxu0 %v376
    %404 = vmatpush.bf16.msra.mxu0 %v373
    %405 = vmatpush.bf16.msra.mxu0 %v370
    %406 = vmatpush.bf16.msra.mxu0 %v367
    %407 = vmatpush.bf16.msra.mxu0 %v364
    %408 = vmatpush.bf16.msra.mxu0 %v361
    %409 = vmatpush.bf16.msra.mxu0 %v358
    %410 = vmatpush.bf16.msra.mxu0 %v355
    %411 = vmatmul.bf16.gmra.mxu0 0
    %v412 = vpop.f32.mrf.mxu0
    %v413 = vadd.f32 %v269, %v412
    %v414 = vpop.f32.mrf.mxu0
    %415 = vdwg.mxu0
    %416 = vmatpush.bf16.msra.mxu0 %v377
    %417 = vmatpush.bf16.msra.mxu0 %v374
    %418 = vmatpush.bf16.msra.mxu0 %v371
    %419 = vmatpush.bf16.msra.mxu0 %v368
    %420 = vmatpush.bf16.msra.mxu0 %v365
    %421 = vmatpush.bf16.msra.mxu0 %v362
    %422 = vmatpush.bf16.msra.mxu0 %v359
    %423 = vmatpush.bf16.msra.mxu0 %v356
    %424 = vmatmul.bf16.gmra.mxu0 0
    %v425 = vpop.f32.mrf.mxu0
    %v426 = vadd.f32 %v270, %v425
    %v427 = vpop.f32.mrf.mxu0
    %428 = vdwg.mxu0
    %429 = vmatpush.bf16.msra.mxu0 %v378
    %430 = vmatpush.bf16.msra.mxu0 %v375
    %431 = vmatpush.bf16.msra.mxu0 %v372
    %432 = vmatpush.bf16.msra.mxu0 %v369
    %433 = vmatpush.bf16.msra.mxu0 %v366
    %434 = vmatpush.bf16.msra.mxu0 %v363
    %435 = vmatpush.bf16.msra.mxu0 %v360
    %436 = vmatpush.bf16.msra.mxu0 %v357
    %437 = vmatmul.bf16.gmra.mxu0 0
    %v438 = vpop.f32.mrf.mxu0
    %v439 = vadd.f32 %v271, %v438
    %v440 = vpop.f32.mrf.mxu0
    %441 = vdwg.mxu0
    %v442 = vadd.f32 %v265, %v413
    %v443 = vxor.u32 %v442, 2147483648
    %v444 = vmul.f32 %v443, 1.442695
    %v445 = vpow.pop %v444
    %v446 = vadd.f32 %v445, 1.0
    %v447 = vrcp.pop %v446
    %v448 = vmul.f32 %v446, %v447
    %v449 = vsub.f32 1.0, %v448
    %v450 = vmul.f32 %v447, %v449
    %v451 = vadd.f32 %v447, %v450
    %vm452 = vweird.f32 %v446
    %vm453 = vweird.f32 %v447
    %vm454 = vmor %vm452, %vm453
    %v455 = vsel %vm454, %v447, %v451
    %v456 = vand.u32 2147483647, %v446
    %vm457 = vcmp.eq.f32.partialorder %v456, 8.507059e+37
    %v458 = vand.u32 %v446, 2147483648
    %v459 = vor.u32 1.1754944e-38, %v458
    %v460 = vsel %vm457, %v459, %v455
    %v461 = vmul.f32 1.0, %v460
    %v462 = vadd.f32 %v266, %v426
    %v463 = vxor.u32 %v462, 2147483648
    %v464 = vmul.f32 %v463, 1.442695
    %v465 = vpow.pop %v464
    %v466 = vadd.f32 %v465, 1.0
    %v467 = vrcp.pop %v466
    %v468 = vmul.f32 %v466, %v467
    %v469 = vsub.f32 1.0, %v468
    %v470 = vmul.f32 %v467, %v469
    %v471 = vadd.f32 %v467, %v470
    %vm472 = vweird.f32 %v466
    %vm473 = vweird.f32 %v467
    %vm474 = vmor %vm472, %vm473
    %v475 = vsel %vm474, %v467, %v471
    %v476 = vand.u32 2147483647, %v466
    %vm477 = vcmp.eq.f32.partialorder %v476, 8.507059e+37
    %v478 = vand.u32 %v466, 2147483648
    %v479 = vor.u32 1.1754944e-38, %v478
    %v480 = vsel %vm477, %v479, %v475
    %v481 = vmul.f32 1.0, %v480
    %v482 = vmul.f32 %v461, %v439
    %v483 = vadd.f32 %v267, %v482
    %v484 = vtanh.pop %v483
    %v485 = vsub.f32 1.0, %v481
    %v486 = vmul.f32 %v485, %v484
    %v487 = vmul.f32 %v481, 0.0
    %v488 = vadd.f32 %v486, %v487
    %v489 = vpack.c.bf16 %v488, %v488
    %490 = vst [vmem:[#allocation12] sm:$0x1] %v489
    %v491 = vld [vmem:[#allocation2] sm:$0x22]
    %v492 = vld [vmem:[#allocation2 + $0x8] sm:$0x2]
    %v493 = vunpack.c.l.bf16 %v491
    %v494 = vunpack.c.h.bf16 %v491
    %v495 = vunpack.c.l.bf16 %v492
    %v496 = vld [vmem:[#allocation2 + $0xc] sm:$0x44]
    %v497 = vld [vmem:[#allocation2 + $0x14] sm:$0x4]
    %v498 = vunpack.c.l.bf16 %v496
    %v499 = vunpack.c.h.bf16 %v496
    %v500 = vunpack.c.l.bf16 %v497
    %v501 = vmul.f32 %v237, %v493
    %v502 = vmul.f32 %v238, %v494
    %v503 = vmul.f32 %v239, %v495
    %v504 = vmul.f32 %v247, %v498
    %v505 = vmul.f32 %v248, %v499
    %v506 = vmul.f32 %v249, %v500
    %v510 = vrot.slane %v504, 2
    %v511 = vrot.slane %v505, 2
    %v512 = vrot.slane %v506, 2
    %v516 = vadd.f32 %v501, %v510
    %v517 = vadd.f32 %v502, %v511
    %v518 = vadd.f32 %v503, %v512
    %519 = vmatpush.bf16.msra.mxu0 %v376
    %520 = vmatpush.bf16.msra.mxu0 %v373
    %521 = vmatpush.bf16.msra.mxu0 %v370
    %522 = vmatpush.bf16.msra.mxu0 %v367
    %523 = vmatpush.bf16.msra.mxu0 %v364
    %524 = vmatpush.bf16.msra.mxu0 %v361
    %525 = vmatpush.bf16.msra.mxu0 %v358
    %526 = vmatpush.bf16.msra.mxu0 %v355
    %527 = vmatmul.bf16.gmra.mxu0 %v489
    %v528 = vpop.f32.mrf.mxu0
    %v529 = vadd.f32 %v269, %v528
    %v530 = vpop.f32.mrf.mxu0
    %531 = vdwg.mxu0
    %532 = vmatpush.bf16.msra.mxu0 %v377
    %533 = vmatpush.bf16.msra.mxu0 %v374
    %534 = vmatpush.bf16.msra.mxu0 %v371
    %535 = vmatpush.bf16.msra.mxu0 %v368
    %536 = vmatpush.bf16.msra.mxu0 %v365
    %537 = vmatpush.bf16.msra.mxu0 %v362
    %538 = vmatpush.bf16.msra.mxu0 %v359
    %539 = vmatpush.bf16.msra.mxu0 %v356
    %540 = vmatmul.bf16.gmra.mxu0 %v489
    %v541 = vpop.f32.mrf.mxu0
    %v542 = vadd.f32 %v270, %v541
    %v543 = vpop.f32.mrf.mxu0
    %544 = vdwg.mxu0
    %545 = vmatpush.bf16.msra.mxu0 %v378
    %546 = vmatpush.bf16.msra.mxu0 %v375
    %547 = vmatpush.bf16.msra.mxu0 %v372
    %548 = vmatpush.bf16.msra.mxu0 %v369
    %549 = vmatpush.bf16.msra.mxu0 %v366
    %550 = vmatpush.bf16.msra.mxu0 %v363
    %551 = vmatpush.bf16.msra.mxu0 %v360
    %552 = vmatpush.bf16.msra.mxu0 %v357
    %553 = vmatmul.bf16.gmra.mxu0 %v489
    %v554 = vpop.f32.mrf.mxu0
    %v555 = vadd.f32 %v271, %v554
    %v556 = vpop.f32.mrf.mxu0
    %557 = vdwg.mxu0
    %v559 = vrot.slane %v529, 6
    %v561 = vadd.f32 %v516, %v559
    %v562 = vxor.u32 %v561, 2147483648
    %v563 = vmul.f32 %v562, 1.442695
    %v564 = vpow.pop %v563
    %v565 = vadd.f32 %v564, 1.0
    %v566 = vrcp.pop %v565
    %v567 = vmul.f32 %v565, %v566
    %v568 = vsub.f32 1.0, %v567
    %v569 = vmul.f32 %v566, %v568
    %v570 = vadd.f32 %v566, %v569
    %vm571 = vweird.f32 %v565
    %vm572 = vweird.f32 %v566
    %vm573 = vmor %vm571, %vm572
    %v574 = vsel %vm573, %v566, %v570
    %v575 = vand.u32 2147483647, %v565
    %vm576 = vcmp.eq.f32.partialorder %v575, 8.507059e+37
    %v577 = vand.u32 %v565, 2147483648
    %v578 = vor.u32 1.1754944e-38, %v577
    %v579 = vsel %vm576, %v578, %v574
    %v580 = vmul.f32 1.0, %v579
    %v582 = vrot.slane %v542, 6
    %v584 = vadd.f32 %v517, %v582
    %v585 = vxor.u32 %v584, 2147483648
    %v586 = vmul.f32 %v585, 1.442695
    %v587 = vpow.pop %v586
    %v588 = vadd.f32 %v587, 1.0
    %v589 = vrcp.pop %v588
    %v590 = vmul.f32 %v588, %v589
    %v591 = vsub.f32 1.0, %v590
    %v592 = vmul.f32 %v589, %v591
    %v593 = vadd.f32 %v589, %v592
    %vm594 = vweird.f32 %v588
    %vm595 = vweird.f32 %v589
    %vm596 = vmor %vm594, %vm595
    %v597 = vsel %vm596, %v589, %v593
    %v598 = vand.u32 2147483647, %v588
    %vm599 = vcmp.eq.f32.partialorder %v598, 8.507059e+37
    %v600 = vand.u32 %v588, 2147483648
    %v601 = vor.u32 1.1754944e-38, %v600
    %v602 = vsel %vm599, %v601, %v597
    %v603 = vmul.f32 1.0, %v602
    %v605 = vrot.slane %v555, 6
    %v607 = vmul.f32 %v580, %v605
    %v608 = vadd.f32 %v518, %v607
    %v609 = vtanh.pop %v608
    %v610 = vsub.f32 1.0, %v603
    %v611 = vmul.f32 %v610, %v609
    %v613 = vrot.slane %v488, 6
    %v615 = vmul.f32 %v603, %v613
    %v616 = vadd.f32 %v611, %v615
    %v617 = vpack.c.bf16 %v616, %v616
    %619 = vst [vmem:[#allocation1] sm:$0xff] %v617
    %s620 = scalar_lea.vmem [#allocation1], 1
    %v621 = vld [vmem:[%s620] ss:$4 sm:$0xff]
    %s623 = scalar_lea.vmem [#allocation12], 1
    %624 = vst [vmem:[%s623] sm:$0x1] %v621
    %v625 = vld [vmem:[#allocation2] sm:$0x44]
    %v626 = vld [vmem:[#allocation2 + $0x8] sm:$0x4]
    %v627 = vunpack.c.l.bf16 %v625
    %v628 = vunpack.c.h.bf16 %v625
    %v629 = vunpack.c.l.bf16 %v626
    %v630 = vld [vmem:[#allocation2 + $0xc] sm:$0x22]
    %v631 = vld [vmem:[#allocation2 + $0x14] sm:$0x2]
    %v632 = vunpack.c.l.bf16 %v630
    %v633 = vunpack.c.h.bf16 %v630
    %v634 = vunpack.c.l.bf16 %v631
    %v635 = vmul.f32 %v237, %v627
    %v636 = vmul.f32 %v238, %v628
    %v637 = vmul.f32 %v239, %v629
    %v638 = vmul.f32 %v247, %v632
    %v639 = vmul.f32 %v248, %v633
    %v640 = vmul.f32 %v249, %v634
    %v644 = vrot.slane %v638, 6
    %v645 = vrot.slane %v639, 6
    %v646 = vrot.slane %v640, 6
    %v650 = vadd.f32 %v635, %v644
    %v651 = vadd.f32 %v636, %v645
    %v652 = vadd.f32 %v637, %v646
    %v654 = vunpack.c.l.b16 %v617
    %v655 = vpack.c.b16 %v654, %v654
    %v656 = vrot.slane %v655, 1
    %658 = vmatpush.bf16.msra.mxu0 %v376
    %659 = vmatpush.bf16.msra.mxu0 %v373
    %660 = vmatpush.bf16.msra.mxu0 %v370
    %661 = vmatpush.bf16.msra.mxu0 %v367
    %662 = vmatpush.bf16.msra.mxu0 %v364
    %663 = vmatpush.bf16.msra.mxu0 %v361
    %664 = vmatpush.bf16.msra.mxu0 %v358
    %665 = vmatpush.bf16.msra.mxu0 %v355
    %666 = vmatmul.bf16.gmra.mxu0 %v656
    %v667 = vpop.f32.mrf.mxu0
    %v668 = vadd.f32 %v269, %v667
    %v669 = vpop.f32.mrf.mxu0
    %670 = vdwg.mxu0
    %671 = vmatpush.bf16.msra.mxu0 %v377
    %672 = vmatpush.bf16.msra.mxu0 %v374
    %673 = vmatpush.bf16.msra.mxu0 %v371
    %674 = vmatpush.bf16.msra.mxu0 %v368
    %675 = vmatpush.bf16.msra.mxu0 %v365
    %676 = vmatpush.bf16.msra.mxu0 %v362
    %677 = vmatpush.bf16.msra.mxu0 %v359
    %678 = vmatpush.bf16.msra.mxu0 %v356
    %679 = vmatmul.bf16.gmra.mxu0 %v656
    %v680 = vpop.f32.mrf.mxu0
    %v681 = vadd.f32 %v270, %v680
    %v682 = vpop.f32.mrf.mxu0
    %683 = vdwg.mxu0
    %684 = vmatpush.bf16.msra.mxu0 %v378
    %685 = vmatpush.bf16.msra.mxu0 %v375
    %686 = vmatpush.bf16.msra.mxu0 %v372
    %687 = vmatpush.bf16.msra.mxu0 %v369
    %688 = vmatpush.bf16.msra.mxu0 %v366
    %689 = vmatpush.bf16.msra.mxu0 %v363
    %690 = vmatpush.bf16.msra.mxu0 %v360
    %691 = vmatpush.bf16.msra.mxu0 %v357
    %692 = vmatmul.bf16.gmra.mxu0 %v656
    %v693 = vpop.f32.mrf.mxu0
    %v694 = vadd.f32 %v271, %v693
    %v695 = vpop.f32.mrf.mxu0
    %696 = vdwg.mxu0
    %v698 = vrot.slane %v668, 4
    %v700 = vadd.f32 %v650, %v698
    %v701 = vxor.u32 %v700, 2147483648
    %v702 = vmul.f32 %v701, 1.442695
    %v703 = vpow.pop %v702
    %v704 = vadd.f32 %v703, 1.0
    %v705 = vrcp.pop %v704
    %v706 = vmul.f32 %v704, %v705
    %v707 = vsub.f32 1.0, %v706
    %v708 = vmul.f32 %v705, %v707
    %v709 = vadd.f32 %v705, %v708
    %vm710 = vweird.f32 %v704
    %vm711 = vweird.f32 %v705
    %vm712 = vmor %vm710, %vm711
    %v713 = vsel %vm712, %v705, %v709
    %v714 = vand.u32 2147483647, %v704
    %vm715 = vcmp.eq.f32.partialorder %v714, 8.507059e+37
    %v716 = vand.u32 %v704, 2147483648
    %v717 = vor.u32 1.1754944e-38, %v716
    %v718 = vsel %vm715, %v717, %v713
    %v719 = vmul.f32 1.0, %v718
    %v721 = vrot.slane %v681, 4
    %v723 = vadd.f32 %v651, %v721
    %v724 = vxor.u32 %v723, 2147483648
    %v725 = vmul.f32 %v724, 1.442695
    %v726 = vpow.pop %v725
    %v727 = vadd.f32 %v726, 1.0
    %v728 = vrcp.pop %v727
    %v729 = vmul.f32 %v727, %v728
    %v730 = vsub.f32 1.0, %v729
    %v731 = vmul.f32 %v728, %v730
    %v732 = vadd.f32 %v728, %v731
    %vm733 = vweird.f32 %v727
    %vm734 = vweird.f32 %v728
    %vm735 = vmor %vm733, %vm734
    %v736 = vsel %vm735, %v728, %v732
    %v737 = vand.u32 2147483647, %v727
    %vm738 = vcmp.eq.f32.partialorder %v737, 8.507059e+37
    %v739 = vand.u32 %v727, 2147483648
    %v740 = vor.u32 1.1754944e-38, %v739
    %v741 = vsel %vm738, %v740, %v736
    %v742 = vmul.f32 1.0, %v741
    %v744 = vrot.slane %v694, 4
    %v746 = vmul.f32 %v719, %v744
    %v747 = vadd.f32 %v652, %v746
    %v748 = vtanh.pop %v747
    %v749 = vsub.f32 1.0, %v742
    %v750 = vmul.f32 %v749, %v748
    %v752 = vrot.slane %v616, 6
    %v754 = vmul.f32 %v742, %v752
    %v755 = vadd.f32 %v750, %v754
    %v756 = vpack.c.bf16 %v755, %v755
    %758 = vst [vmem:[#allocation1] sm:$0xff] %v756
    %s759 = scalar_lea.vmem [#allocation1], 2
    %v760 = vld [vmem:[%s759] ss:$4 sm:$0xff]
    %s762 = scalar_lea.vmem [#allocation12], 2
    %763 = vst [vmem:[%s762] sm:$0x1] %v760
    %v764 = vld [vmem:[#allocation2] sm:$0x88]
    %v765 = vld [vmem:[#allocation2 + $0x8] sm:$0x8]
    %v766 = vunpack.c.l.bf16 %v764
    %v767 = vunpack.c.h.bf16 %v764
    %v768 = vunpack.c.l.bf16 %v765
    %v769 = vld [vmem:[#allocation2 + $0xc] sm:$0x11]
    %v770 = vld [vmem:[#allocation2 + $0x14] sm:$0x1]
    %v771 = vunpack.c.l.bf16 %v769
    %v772 = vunpack.c.h.bf16 %v769
    %v773 = vunpack.c.l.bf16 %v770
    %v774 = vmul.f32 %v237, %v766
    %v775 = vmul.f32 %v238, %v767
    %v776 = vmul.f32 %v239, %v768
    %v777 = vmul.f32 %v247, %v771
    %v778 = vmul.f32 %v248, %v772
    %v779 = vmul.f32 %v249, %v773
    %v783 = vrot.slane %v777, 2
    %v784 = vrot.slane %v778, 2
    %v785 = vrot.slane %v779, 2
    %v789 = vadd.f32 %v774, %v783
    %v790 = vadd.f32 %v775, %v784
    %v791 = vadd.f32 %v776, %v785
    %v793 = vunpack.c.l.b16 %v756
    %v794 = vpack.c.b16 %v793, %v793
    %v795 = vrot.slane %v794, 2
    %797 = vmatpush.bf16.msra.mxu0 %v376
    %798 = vmatpush.bf16.msra.mxu0 %v373
    %799 = vmatpush.bf16.msra.mxu0 %v370
    %800 = vmatpush.bf16.msra.mxu0 %v367
    %801 = vmatpush.bf16.msra.mxu0 %v364
    %802 = vmatpush.bf16.msra.mxu0 %v361
    %803 = vmatpush.bf16.msra.mxu0 %v358
    %804 = vmatpush.bf16.msra.mxu0 %v355
    %805 = vmatmul.bf16.gmra.mxu0 %v795
    %v806 = vpop.f32.mrf.mxu0
    %v807 = vadd.f32 %v269, %v806
    %v808 = vpop.f32.mrf.mxu0
    %809 = vdwg.mxu0
    %810 = vmatpush.bf16.msra.mxu0 %v377
    %811 = vmatpush.bf16.msra.mxu0 %v374
    %812 = vmatpush.bf16.msra.mxu0 %v371
    %813 = vmatpush.bf16.msra.mxu0 %v368
    %814 = vmatpush.bf16.msra.mxu0 %v365
    %815 = vmatpush.bf16.msra.mxu0 %v362
    %816 = vmatpush.bf16.msra.mxu0 %v359
    %817 = vmatpush.bf16.msra.mxu0 %v356
    %818 = vmatmul.bf16.gmra.mxu0 %v795
    %v819 = vpop.f32.mrf.mxu0
    %v820 = vadd.f32 %v270, %v819
    %v821 = vpop.f32.mrf.mxu0
    %822 = vdwg.mxu0
    %823 = vmatpush.bf16.msra.mxu0 %v378
    %824 = vmatpush.bf16.msra.mxu0 %v375
    %825 = vmatpush.bf16.msra.mxu0 %v372
    %826 = vmatpush.bf16.msra.mxu0 %v369
    %827 = vmatpush.bf16.msra.mxu0 %v366
    %828 = vmatpush.bf16.msra.mxu0 %v363
    %829 = vmatpush.bf16.msra.mxu0 %v360
    %830 = vmatpush.bf16.msra.mxu0 %v357
    %831 = vmatmul.bf16.gmra.mxu0 %v795
    %v832 = vpop.f32.mrf.mxu0
    %v833 = vadd.f32 %v271, %v832
    %v834 = vpop.f32.mrf.mxu0
    %835 = vdwg.mxu0
    %v837 = vrot.slane %v807, 2
    %v839 = vadd.f32 %v789, %v837
    %v840 = vxor.u32 %v839, 2147483648
    %v841 = vmul.f32 %v840, 1.442695
    %v842 = vpow.pop %v841
    %v843 = vadd.f32 %v842, 1.0
    %v844 = vrcp.pop %v843
    %v845 = vmul.f32 %v843, %v844
    %v846 = vsub.f32 1.0, %v845
    %v847 = vmul.f32 %v844, %v846
    %v848 = vadd.f32 %v844, %v847
    %vm849 = vweird.f32 %v843
    %vm850 = vweird.f32 %v844
    %vm851 = vmor %vm849, %vm850
    %v852 = vsel %vm851, %v844, %v848
    %v853 = vand.u32 2147483647, %v843
    %vm854 = vcmp.eq.f32.partialorder %v853, 8.507059e+37
    %v855 = vand.u32 %v843, 2147483648
    %v856 = vor.u32 1.1754944e-38, %v855
    %v857 = vsel %vm854, %v856, %v852
    %v858 = vmul.f32 1.0, %v857
    %v860 = vrot.slane %v820, 2
    %v862 = vadd.f32 %v790, %v860
    %v863 = vxor.u32 %v862, 2147483648
    %v864 = vmul.f32 %v863, 1.442695
    %v865 = vpow.pop %v864
    %v866 = vadd.f32 %v865, 1.0
    %v867 = vrcp.pop %v866
    %v868 = vmul.f32 %v866, %v867
    %v869 = vsub.f32 1.0, %v868
    %v870 = vmul.f32 %v867, %v869
    %v871 = vadd.f32 %v867, %v870
    %vm872 = vweird.f32 %v866
    %vm873 = vweird.f32 %v867
    %vm874 = vmor %vm872, %vm873
    %v875 = vsel %vm874, %v867, %v871
    %v876 = vand.u32 2147483647, %v866
    %vm877 = vcmp.eq.f32.partialorder %v876, 8.507059e+37
    %v878 = vand.u32 %v866, 2147483648
    %v879 = vor.u32 1.1754944e-38, %v878
    %v880 = vsel %vm877, %v879, %v875
    %v881 = vmul.f32 1.0, %v880
    %v883 = vrot.slane %v833, 2
    %v885 = vmul.f32 %v858, %v883
    %v886 = vadd.f32 %v791, %v885
    %v887 = vtanh.pop %v886
    %v888 = vsub.f32 1.0, %v881
    %v889 = vmul.f32 %v888, %v887
    %v891 = vrot.slane %v755, 6
    %v893 = vmul.f32 %v881, %v891
    %v894 = vadd.f32 %v889, %v893
    %v895 = vpack.c.bf16 %v894, %v894
    %897 = vst [vmem:[#allocation1] sm:$0xff] %v895
    %s898 = scalar_lea.vmem [#allocation1], 3
    %v899 = vld [vmem:[%s898] ss:$4 sm:$0xff]
    %s901 = scalar_lea.vmem [#allocation12], 3
    %902 = vst [vmem:[%s901] sm:$0x1] %v899
    %v903 = vld [vmem:[#allocation2 + $0xc] sm:$0x11]
    %v904 = vld [vmem:[#allocation2 + $0x14] sm:$0x1]
    %v905 = vunpack.c.l.bf16 %v903
    %v906 = vunpack.c.h.bf16 %v903
    %v907 = vunpack.c.l.bf16 %v904
    %v908 = vld [vmem:[#allocation2] sm:$0x88]
    %v909 = vld [vmem:[#allocation2 + $0x8] sm:$0x8]
    %v910 = vunpack.c.l.bf16 %v908
    %v911 = vunpack.c.h.bf16 %v908
    %v912 = vunpack.c.l.bf16 %v909
    %v913 = vmul.f32 %v237, %v905
    %v914 = vmul.f32 %v238, %v906
    %v915 = vmul.f32 %v239, %v907
    %v916 = vmul.f32 %v247, %v910
    %v917 = vmul.f32 %v248, %v911
    %v918 = vmul.f32 %v249, %v912
    %v922 = vrot.slane %v916, 6
    %v923 = vrot.slane %v917, 6
    %v924 = vrot.slane %v918, 6
    %v928 = vadd.f32 %v913, %v922
    %v929 = vadd.f32 %v914, %v923
    %v930 = vadd.f32 %v915, %v924
    %v932 = vunpack.c.l.b16 %v895
    %v933 = vpack.c.b16 %v932, %v932
    %v934 = vrot.slane %v933, 3
    %936 = vmatpush.bf16.msra.mxu0 %v376
    %937 = vmatpush.bf16.msra.mxu0 %v373
    %938 = vmatpush.bf16.msra.mxu0 %v370
    %939 = vmatpush.bf16.msra.mxu0 %v367
    %940 = vmatpush.bf16.msra.mxu0 %v364
    %941 = vmatpush.bf16.msra.mxu0 %v361
    %942 = vmatpush.bf16.msra.mxu0 %v358
    %943 = vmatpush.bf16.msra.mxu0 %v355
    %944 = vmatmul.bf16.gmra.mxu0 %v934
    %v945 = vpop.f32.mrf.mxu0
    %v946 = vadd.f32 %v269, %v945
    %v947 = vpop.f32.mrf.mxu0
    %948 = vdwg.mxu0
    %949 = vmatpush.bf16.msra.mxu0 %v377
    %950 = vmatpush.bf16.msra.mxu0 %v374
    %951 = vmatpush.bf16.msra.mxu0 %v371
    %952 = vmatpush.bf16.msra.mxu0 %v368
    %953 = vmatpush.bf16.msra.mxu0 %v365
    %954 = vmatpush.bf16.msra.mxu0 %v362
    %955 = vmatpush.bf16.msra.mxu0 %v359
    %956 = vmatpush.bf16.msra.mxu0 %v356
    %957 = vmatmul.bf16.gmra.mxu0 %v934
    %v958 = vpop.f32.mrf.mxu0
    %v959 = vadd.f32 %v270, %v958
    %v960 = vpop.f32.mrf.mxu0
    %961 = vdwg.mxu0
    %962 = vmatpush.bf16.msra.mxu0 %v378
    %963 = vmatpush.bf16.msra.mxu0 %v375
    %964 = vmatpush.bf16.msra.mxu0 %v372
    %965 = vmatpush.bf16.msra.mxu0 %v369
    %966 = vmatpush.bf16.msra.mxu0 %v366
    %967 = vmatpush.bf16.msra.mxu0 %v363
    %968 = vmatpush.bf16.msra.mxu0 %v360
    %969 = vmatpush.bf16.msra.mxu0 %v357
    %970 = vmatmul.bf16.gmra.mxu0 %v934
    %v971 = vpop.f32.mrf.mxu0
    %v972 = vadd.f32 %v271, %v971
    %v973 = vpop.f32.mrf.mxu0
    %974 = vdwg.mxu0
    %v975 = vadd.f32 %v928, %v946
    %v976 = vxor.u32 %v975, 2147483648
    %v977 = vmul.f32 %v976, 1.442695
    %v978 = vpow.pop %v977
    %v979 = vadd.f32 %v978, 1.0
    %v980 = vrcp.pop %v979
    %v981 = vmul.f32 %v979, %v980
    %v982 = vsub.f32 1.0, %v981
    %v983 = vmul.f32 %v980, %v982
    %v984 = vadd.f32 %v980, %v983
    %vm985 = vweird.f32 %v979
    %vm986 = vweird.f32 %v980
    %vm987 = vmor %vm985, %vm986
    %v988 = vsel %vm987, %v980, %v984
    %v989 = vand.u32 2147483647, %v979
    %vm990 = vcmp.eq.f32.partialorder %v989, 8.507059e+37
    %v991 = vand.u32 %v979, 2147483648
    %v992 = vor.u32 1.1754944e-38, %v991
    %v993 = vsel %vm990, %v992, %v988
    %v994 = vmul.f32 1.0, %v993
    %v995 = vadd.f32 %v929, %v959
    %v996 = vxor.u32 %v995, 2147483648
    %v997 = vmul.f32 %v996, 1.442695
    %v998 = vpow.pop %v997
    %v999 = vadd.f32 %v998, 1.0
    %v1000 = vrcp.pop %v999
    %v1001 = vmul.f32 %v999, %v1000
    %v1002 = vsub.f32 1.0, %v1001
    %v1003 = vmul.f32 %v1000, %v1002
    %v1004 = vadd.f32 %v1000, %v1003
    %vm1005 = vweird.f32 %v999
    %vm1006 = vweird.f32 %v1000
    %vm1007 = vmor %vm1005, %vm1006
    %v1008 = vsel %vm1007, %v1000, %v1004
    %v1009 = vand.u32 2147483647, %v999
    %vm1010 = vcmp.eq.f32.partialorder %v1009, 8.507059e+37
    %v1011 = vand.u32 %v999, 2147483648
    %v1012 = vor.u32 1.1754944e-38, %v1011
    %v1013 = vsel %vm1010, %v1012, %v1008
    %v1014 = vmul.f32 1.0, %v1013
    %v1015 = vmul.f32 %v994, %v972
    %v1016 = vadd.f32 %v930, %v1015
    %v1017 = vtanh.pop %v1016
    %v1018 = vsub.f32 1.0, %v1014
    %v1019 = vmul.f32 %v1018, %v1017
    %v1021 = vrot.slane %v894, 6
    %v1023 = vmul.f32 %v1014, %v1021
    %v1024 = vadd.f32 %v1019, %v1023
    %v1025 = vpack.c.bf16 %v1024, %v1024
    %s1026 = scalar_lea.vmem [#allocation12], 4
    %1027 = vst [vmem:[%s1026] sm:$0x1] %v1025
    %v1028 = vld [vmem:[#allocation2 + $0xc] sm:$0x22]
    %v1029 = vld [vmem:[#allocation2 + $0x14] sm:$0x2]
    %v1030 = vunpack.c.l.bf16 %v1028
    %v1031 = vunpack.c.h.bf16 %v1028
    %v1032 = vunpack.c.l.bf16 %v1029
    %v1033 = vld [vmem:[#allocation2] sm:$0x44]
    %v1034 = vld [vmem:[#allocation2 + $0x8] sm:$0x4]
    %v1035 = vunpack.c.l.bf16 %v1033
    %v1036 = vunpack.c.h.bf16 %v1033
    %v1037 = vunpack.c.l.bf16 %v1034
    %v1038 = vmul.f32 %v237, %v1030
    %v1039 = vmul.f32 %v238, %v1031
    %v1040 = vmul.f32 %v239, %v1032
    %v1041 = vmul.f32 %v247, %v1035
    %v1042 = vmul.f32 %v248, %v1036
    %v1043 = vmul.f32 %v249, %v1037
    %v1047 = vrot.slane %v1041, 2
    %v1048 = vrot.slane %v1042, 2
    %v1049 = vrot.slane %v1043, 2
    %v1053 = vadd.f32 %v1038, %v1047
    %v1054 = vadd.f32 %v1039, %v1048
    %v1055 = vadd.f32 %v1040, %v1049
    %1056 = vmatpush.bf16.msra.mxu0 %v376
    %1057 = vmatpush.bf16.msra.mxu0 %v373
    %1058 = vmatpush.bf16.msra.mxu0 %v370
    %1059 = vmatpush.bf16.msra.mxu0 %v367
    %1060 = vmatpush.bf16.msra.mxu0 %v364
    %1061 = vmatpush.bf16.msra.mxu0 %v361
    %1062 = vmatpush.bf16.msra.mxu0 %v358
    %1063 = vmatpush.bf16.msra.mxu0 %v355
    %1064 = vmatmul.bf16.gmra.mxu0 %v1025
    %v1065 = vpop.f32.mrf.mxu0
    %v1066 = vadd.f32 %v269, %v1065
    %v1067 = vpop.f32.mrf.mxu0
    %1068 = vdwg.mxu0
    %1069 = vmatpush.bf16.msra.mxu0 %v377
    %1070 = vmatpush.bf16.msra.mxu0 %v374
    %1071 = vmatpush.bf16.msra.mxu0 %v371
    %1072 = vmatpush.bf16.msra.mxu0 %v368
    %1073 = vmatpush.bf16.msra.mxu0 %v365
    %1074 = vmatpush.bf16.msra.mxu0 %v362
    %1075 = vmatpush.bf16.msra.mxu0 %v359
    %1076 = vmatpush.bf16.msra.mxu0 %v356
    %1077 = vmatmul.bf16.gmra.mxu0 %v1025
    %v1078 = vpop.f32.mrf.mxu0
    %v1079 = vadd.f32 %v270, %v1078
    %v1080 = vpop.f32.mrf.mxu0
    %1081 = vdwg.mxu0
    %1082 = vmatpush.bf16.msra.mxu0 %v378
    %1083 = vmatpush.bf16.msra.mxu0 %v375
    %1084 = vmatpush.bf16.msra.mxu0 %v372
    %1085 = vmatpush.bf16.msra.mxu0 %v369
    %1086 = vmatpush.bf16.msra.mxu0 %v366
    %1087 = vmatpush.bf16.msra.mxu0 %v363
    %1088 = vmatpush.bf16.msra.mxu0 %v360
    %1089 = vmatpush.bf16.msra.mxu0 %v357
    %1090 = vmatmul.bf16.gmra.mxu0 %v1025
    %v1091 = vpop.f32.mrf.mxu0
    %v1092 = vadd.f32 %v271, %v1091
    %v1093 = vpop.f32.mrf.mxu0
    %1094 = vdwg.mxu0
    %v1096 = vrot.slane %v1066, 6
    %v1098 = vadd.f32 %v1053, %v1096
    %v1099 = vxor.u32 %v1098, 2147483648
    %v1100 = vmul.f32 %v1099, 1.442695
    %v1101 = vpow.pop %v1100
    %v1102 = vadd.f32 %v1101, 1.0
    %v1103 = vrcp.pop %v1102
    %v1104 = vmul.f32 %v1102, %v1103
    %v1105 = vsub.f32 1.0, %v1104
    %v1106 = vmul.f32 %v1103, %v1105
    %v1107 = vadd.f32 %v1103, %v1106
    %vm1108 = vweird.f32 %v1102
    %vm1109 = vweird.f32 %v1103
    %vm1110 = vmor %vm1108, %vm1109
    %v1111 = vsel %vm1110, %v1103, %v1107
    %v1112 = vand.u32 2147483647, %v1102
    %vm1113 = vcmp.eq.f32.partialorder %v1112, 8.507059e+37
    %v1114 = vand.u32 %v1102, 2147483648
    %v1115 = vor.u32 1.1754944e-38, %v1114
    %v1116 = vsel %vm1113, %v1115, %v1111
    %v1117 = vmul.f32 1.0, %v1116
    %v1119 = vrot.slane %v1079, 6
    %v1121 = vadd.f32 %v1054, %v1119
    %v1122 = vxor.u32 %v1121, 2147483648
    %v1123 = vmul.f32 %v1122, 1.442695
    %v1124 = vpow.pop %v1123
    %v1125 = vadd.f32 %v1124, 1.0
    %v1126 = vrcp.pop %v1125
    %v1127 = vmul.f32 %v1125, %v1126
    %v1128 = vsub.f32 1.0, %v1127
    %v1129 = vmul.f32 %v1126, %v1128
    %v1130 = vadd.f32 %v1126, %v1129
    %vm1131 = vweird.f32 %v1125
    %vm1132 = vweird.f32 %v1126
    %vm1133 = vmor %vm1131, %vm1132
    %v1134 = vsel %vm1133, %v1126, %v1130
    %v1135 = vand.u32 2147483647, %v1125
    %vm1136 = vcmp.eq.f32.partialorder %v1135, 8.507059e+37
    %v1137 = vand.u32 %v1125, 2147483648
    %v1138 = vor.u32 1.1754944e-38, %v1137
    %v1139 = vsel %vm1136, %v1138, %v1134
    %v1140 = vmul.f32 1.0, %v1139
    %v1142 = vrot.slane %v1092, 6
    %v1144 = vmul.f32 %v1117, %v1142
    %v1145 = vadd.f32 %v1055, %v1144
    %v1146 = vtanh.pop %v1145
    %v1147 = vsub.f32 1.0, %v1140
    %v1148 = vmul.f32 %v1147, %v1146
    %v1150 = vrot.slane %v1024, 6
    %v1152 = vmul.f32 %v1140, %v1150
    %v1153 = vadd.f32 %v1148, %v1152
    %v1154 = vpack.c.bf16 %v1153, %v1153
    %1156 = vst [vmem:[#allocation1] sm:$0xff] %v1154
    %s1157 = scalar_lea.vmem [#allocation1], 1
    %v1158 = vld [vmem:[%s1157] ss:$4 sm:$0xff]
    %s1160 = scalar_lea.vmem [#allocation12], 5
    %1161 = vst [vmem:[%s1160] sm:$0x1] %v1158
    %v1162 = vld [vmem:[#allocation2 + $0xc] sm:$0x44]
    %v1163 = vld [vmem:[#allocation2 + $0x14] sm:$0x4]
    %v1164 = vunpack.c.l.bf16 %v1162
    %v1165 = vunpack.c.h.bf16 %v1162
    %v1166 = vunpack.c.l.bf16 %v1163
    %v1167 = vld [vmem:[#allocation2] sm:$0x22]
    %v1168 = vld [vmem:[#allocation2 + $0x8] sm:$0x2]
    %v1169 = vunpack.c.l.bf16 %v1167
    %v1170 = vunpack.c.h.bf16 %v1167
    %v1171 = vunpack.c.l.bf16 %v1168
    %v1172 = vmul.f32 %v237, %v1164
    %v1173 = vmul.f32 %v238, %v1165
    %v1174 = vmul.f32 %v239, %v1166
    %v1175 = vmul.f32 %v247, %v1169
    %v1176 = vmul.f32 %v248, %v1170
    %v1177 = vmul.f32 %v249, %v1171
    %v1181 = vrot.slane %v1175, 6
    %v1182 = vrot.slane %v1176, 6
    %v1183 = vrot.slane %v1177, 6
    %v1187 = vadd.f32 %v1172, %v1181
    %v1188 = vadd.f32 %v1173, %v1182
    %v1189 = vadd.f32 %v1174, %v1183
    %v1191 = vunpack.c.l.b16 %v1154
    %v1192 = vpack.c.b16 %v1191, %v1191
    %v1193 = vrot.slane %v1192, 1
    %1195 = vmatpush.bf16.msra.mxu0 %v376
    %1196 = vmatpush.bf16.msra.mxu0 %v373
    %1197 = vmatpush.bf16.msra.mxu0 %v370
    %1198 = vmatpush.bf16.msra.mxu0 %v367
    %1199 = vmatpush.bf16.msra.mxu0 %v364
    %1200 = vmatpush.bf16.msra.mxu0 %v361
    %1201 = vmatpush.bf16.msra.mxu0 %v358
    %1202 = vmatpush.bf16.msra.mxu0 %v355
    %1203 = vmatmul.bf16.gmra.mxu0 %v1193
    %v1204 = vpop.f32.mrf.mxu0
    %v1205 = vadd.f32 %v269, %v1204
    %v1206 = vpop.f32.mrf.mxu0
    %1207 = vdwg.mxu0
    %1208 = vmatpush.bf16.msra.mxu0 %v377
    %1209 = vmatpush.bf16.msra.mxu0 %v374
    %1210 = vmatpush.bf16.msra.mxu0 %v371
    %1211 = vmatpush.bf16.msra.mxu0 %v368
    %1212 = vmatpush.bf16.msra.mxu0 %v365
    %1213 = vmatpush.bf16.msra.mxu0 %v362
    %1214 = vmatpush.bf16.msra.mxu0 %v359
    %1215 = vmatpush.bf16.msra.mxu0 %v356
    %1216 = vmatmul.bf16.gmra.mxu0 %v1193
    %v1217 = vpop.f32.mrf.mxu0
    %v1218 = vadd.f32 %v270, %v1217
    %v1219 = vpop.f32.mrf.mxu0
    %1220 = vdwg.mxu0
    %1221 = vmatpush.bf16.msra.mxu0 %v378
    %1222 = vmatpush.bf16.msra.mxu0 %v375
    %1223 = vmatpush.bf16.msra.mxu0 %v372
    %1224 = vmatpush.bf16.msra.mxu0 %v369
    %1225 = vmatpush.bf16.msra.mxu0 %v366
    %1226 = vmatpush.bf16.msra.mxu0 %v363
    %1227 = vmatpush.bf16.msra.mxu0 %v360
    %1228 = vmatpush.bf16.msra.mxu0 %v357
    %1229 = vmatmul.bf16.gmra.mxu0 %v1193
    %v1230 = vpop.f32.mrf.mxu0
    %v1231 = vadd.f32 %v271, %v1230
    %v1232 = vpop.f32.mrf.mxu0
    %1233 = vdwg.mxu0
    %v1235 = vrot.slane %v1205, 4
    %v1237 = vadd.f32 %v1187, %v1235
    %v1238 = vxor.u32 %v1237, 2147483648
    %v1239 = vmul.f32 %v1238, 1.442695
    %v1240 = vpow.pop %v1239
    %v1241 = vadd.f32 %v1240, 1.0
    %v1242 = vrcp.pop %v1241
    %v1243 = vmul.f32 %v1241, %v1242
    %v1244 = vsub.f32 1.0, %v1243
    %v1245 = vmul.f32 %v1242, %v1244
    %v1246 = vadd.f32 %v1242, %v1245
    %vm1247 = vweird.f32 %v1241
    %vm1248 = vweird.f32 %v1242
    %vm1249 = vmor %vm1247, %vm1248
    %v1250 = vsel %vm1249, %v1242, %v1246
    %v1251 = vand.u32 2147483647, %v1241
    %vm1252 = vcmp.eq.f32.partialorder %v1251, 8.507059e+37
    %v1253 = vand.u32 %v1241, 2147483648
    %v1254 = vor.u32 1.1754944e-38, %v1253
    %v1255 = vsel %vm1252, %v1254, %v1250
    %v1256 = vmul.f32 1.0, %v1255
    %v1258 = vrot.slane %v1218, 4
    %v1260 = vadd.f32 %v1188, %v1258
    %v1261 = vxor.u32 %v1260, 2147483648
    %v1262 = vmul.f32 %v1261, 1.442695
    %v1263 = vpow.pop %v1262
    %v1264 = vadd.f32 %v1263, 1.0
    %v1265 = vrcp.pop %v1264
    %v1266 = vmul.f32 %v1264, %v1265
    %v1267 = vsub.f32 1.0, %v1266
    %v1268 = vmul.f32 %v1265, %v1267
    %v1269 = vadd.f32 %v1265, %v1268
    %vm1270 = vweird.f32 %v1264
    %vm1271 = vweird.f32 %v1265
    %vm1272 = vmor %vm1270, %vm1271
    %v1273 = vsel %vm1272, %v1265, %v1269
    %v1274 = vand.u32 2147483647, %v1264
    %vm1275 = vcmp.eq.f32.partialorder %v1274, 8.507059e+37
    %v1276 = vand.u32 %v1264, 2147483648
    %v1277 = vor.u32 1.1754944e-38, %v1276
    %v1278 = vsel %vm1275, %v1277, %v1273
    %v1279 = vmul.f32 1.0, %v1278
    %v1281 = vrot.slane %v1231, 4
    %v1283 = vmul.f32 %v1256, %v1281
    %v1284 = vadd.f32 %v1189, %v1283
    %v1285 = vtanh.pop %v1284
    %v1286 = vsub.f32 1.0, %v1279
    %v1287 = vmul.f32 %v1286, %v1285
    %v1289 = vrot.slane %v1153, 6
    %v1291 = vmul.f32 %v1279, %v1289
    %v1292 = vadd.f32 %v1287, %v1291
    %v1293 = vpack.c.bf16 %v1292, %v1292
    %1295 = vst [vmem:[#allocation1] sm:$0xff] %v1293
    %s1296 = scalar_lea.vmem [#allocation1], 2
    %v1297 = vld [vmem:[%s1296] ss:$4 sm:$0xff]
    %s1299 = scalar_lea.vmem [#allocation12], 6
    %1300 = vst [vmem:[%s1299] sm:$0x1] %v1297
    %v1301 = vld [vmem:[#allocation2 + $0xc] sm:$0x88]
    %v1302 = vld [vmem:[#allocation2 + $0x14] sm:$0x8]
    %v1303 = vunpack.c.l.bf16 %v1301
    %v1304 = vunpack.c.h.bf16 %v1301
    %v1305 = vunpack.c.l.bf16 %v1302
    %v1306 = vld [vmem:[#allocation2] sm:$0x11]
    %v1307 = vld [vmem:[#allocation2 + $0x8] sm:$0x1]
    %v1308 = vunpack.c.l.bf16 %v1306
    %v1309 = vunpack.c.h.bf16 %v1306
    %v1310 = vunpack.c.l.bf16 %v1307
    %v1311 = vmul.f32 %v237, %v1303
    %v1312 = vmul.f32 %v238, %v1304
    %v1313 = vmul.f32 %v239, %v1305
    %v1314 = vmul.f32 %v247, %v1308
    %v1315 = vmul.f32 %v248, %v1309
    %v1316 = vmul.f32 %v249, %v1310
    %v1320 = vrot.slane %v1314, 2
    %v1321 = vrot.slane %v1315, 2
    %v1322 = vrot.slane %v1316, 2
    %v1326 = vadd.f32 %v1311, %v1320
    %v1327 = vadd.f32 %v1312, %v1321
    %v1328 = vadd.f32 %v1313, %v1322
    %v1330 = vunpack.c.l.b16 %v1293
    %v1331 = vpack.c.b16 %v1330, %v1330
    %v1332 = vrot.slane %v1331, 2
    %1334 = vmatpush.bf16.msra.mxu0 %v376
    %1335 = vmatpush.bf16.msra.mxu0 %v373
    %1336 = vmatpush.bf16.msra.mxu0 %v370
    %1337 = vmatpush.bf16.msra.mxu0 %v367
    %1338 = vmatpush.bf16.msra.mxu0 %v364
    %1339 = vmatpush.bf16.msra.mxu0 %v361
    %1340 = vmatpush.bf16.msra.mxu0 %v358
    %1341 = vmatpush.bf16.msra.mxu0 %v355
    %1342 = vmatmul.bf16.gmra.mxu0 %v1332
    %v1343 = vpop.f32.mrf.mxu0
    %v1344 = vadd.f32 %v269, %v1343
    %v1345 = vpop.f32.mrf.mxu0
    %1346 = vdwg.mxu0
    %1347 = vmatpush.bf16.msra.mxu0 %v377
    %1348 = vmatpush.bf16.msra.mxu0 %v374
    %1349 = vmatpush.bf16.msra.mxu0 %v371
    %1350 = vmatpush.bf16.msra.mxu0 %v368
    %1351 = vmatpush.bf16.msra.mxu0 %v365
    %1352 = vmatpush.bf16.msra.mxu0 %v362
    %1353 = vmatpush.bf16.msra.mxu0 %v359
    %1354 = vmatpush.bf16.msra.mxu0 %v356
    %1355 = vmatmul.bf16.gmra.mxu0 %v1332
    %v1356 = vpop.f32.mrf.mxu0
    %v1357 = vadd.f32 %v270, %v1356
    %v1358 = vpop.f32.mrf.mxu0
    %1359 = vdwg.mxu0
    %1360 = vmatpush.bf16.msra.mxu0 %v378
    %1361 = vmatpush.bf16.msra.mxu0 %v375
    %1362 = vmatpush.bf16.msra.mxu0 %v372
    %1363 = vmatpush.bf16.msra.mxu0 %v369
    %1364 = vmatpush.bf16.msra.mxu0 %v366
    %1365 = vmatpush.bf16.msra.mxu0 %v363
    %1366 = vmatpush.bf16.msra.mxu0 %v360
    %1367 = vmatpush.bf16.msra.mxu0 %v357
    %1368 = vmatmul.bf16.gmra.mxu0 %v1332
    %v1369 = vpop.f32.mrf.mxu0
    %v1370 = vadd.f32 %v271, %v1369
    %v1371 = vpop.f32.mrf.mxu0
    %1372 = vdwg.mxu0
    %v1374 = vrot.slane %v1344, 2
    %v1376 = vadd.f32 %v1326, %v1374
    %v1377 = vxor.u32 %v1376, 2147483648
    %v1378 = vmul.f32 %v1377, 1.442695
    %v1379 = vpow.pop %v1378
    %v1380 = vadd.f32 %v1379, 1.0
    %v1381 = vrcp.pop %v1380
    %v1382 = vmul.f32 %v1380, %v1381
    %v1383 = vsub.f32 1.0, %v1382
    %v1384 = vmul.f32 %v1381, %v1383
    %v1385 = vadd.f32 %v1381, %v1384
    %vm1386 = vweird.f32 %v1380
    %vm1387 = vweird.f32 %v1381
    %vm1388 = vmor %vm1386, %vm1387
    %v1389 = vsel %vm1388, %v1381, %v1385
    %v1390 = vand.u32 2147483647, %v1380
    %vm1391 = vcmp.eq.f32.partialorder %v1390, 8.507059e+37
    %v1392 = vand.u32 %v1380, 2147483648
    %v1393 = vor.u32 1.1754944e-38, %v1392
    %v1394 = vsel %vm1391, %v1393, %v1389
    %v1395 = vmul.f32 1.0, %v1394
    %v1397 = vrot.slane %v1357, 2
    %v1399 = vadd.f32 %v1327, %v1397
    %v1400 = vxor.u32 %v1399, 2147483648
    %v1401 = vmul.f32 %v1400, 1.442695
    %v1402 = vpow.pop %v1401
    %v1403 = vadd.f32 %v1402, 1.0
    %v1404 = vrcp.pop %v1403
    %v1405 = vmul.f32 %v1403, %v1404
    %v1406 = vsub.f32 1.0, %v1405
    %v1407 = vmul.f32 %v1404, %v1406
    %v1408 = vadd.f32 %v1404, %v1407
    %vm1409 = vweird.f32 %v1403
    %vm1410 = vweird.f32 %v1404
    %vm1411 = vmor %vm1409, %vm1410
    %v1412 = vsel %vm1411, %v1404, %v1408
    %v1413 = vand.u32 2147483647, %v1403
    %vm1414 = vcmp.eq.f32.partialorder %v1413, 8.507059e+37
    %v1415 = vand.u32 %v1403, 2147483648
    %v1416 = vor.u32 1.1754944e-38, %v1415
    %v1417 = vsel %vm1414, %v1416, %v1412
    %v1418 = vmul.f32 1.0, %v1417
    %v1420 = vrot.slane %v1370, 2
    %v1422 = vmul.f32 %v1395, %v1420
    %v1423 = vadd.f32 %v1328, %v1422
    %v1424 = vtanh.pop %v1423
    %v1425 = vsub.f32 1.0, %v1418
    %v1426 = vmul.f32 %v1425, %v1424
    %v1428 = vrot.slane %v1292, 6
    %v1430 = vmul.f32 %v1418, %v1428
    %v1431 = vadd.f32 %v1426, %v1430
    %v1432 = vpack.c.bf16 %v1431, %v1431
    %1434 = vst [vmem:[#allocation1] sm:$0xff] %v1432
    %s1435 = scalar_lea.vmem [#allocation1], 3
    %v1436 = vld [vmem:[%s1435] ss:$4 sm:$0xff]
    %s1438 = scalar_lea.vmem [#allocation12], 7
    %1439 = vst [vmem:[%s1438] sm:$0x1] %v1436
    %1440 = vst [vmem:[#allocation13 - $0x6] sm:$0xc0] %v1431
    %v1441 = vld [vmem:[#allocation12] sm:$0x1]
    %v1442 = vunpack.c.l.bf16 %v1441
    %v1443 = vld [vmem:[%s1438] sm:$0x1]
    %v1444 = vunpack.c.l.bf16 %v1443
    %v1445 = vmul.f32 %v237, %v1442
    %v1446 = vmul.f32 %v247, %v1444
    %v1447 = vadd.f32 %v1445, %v1446
    %v1448 = vpack.c.bf16 %v1447, %v1447
    %1449 = vst [vmem:[#allocation12] sm:$0x1] %v1448
    %v1450 = vmul.f32 %v237, %v1444
    %v1451 = vmul.f32 %v247, %v1442
    %v1452 = vadd.f32 %v1450, %v1451
    %v1453 = vpack.c.bf16 %v1452, %v1452
    %1454 = vst [vmem:[%s1438] sm:$0x1] %v1453
    %v1455 = vld [vmem:[%s623] sm:$0x1]
    %v1456 = vunpack.c.l.bf16 %v1455
    %v1457 = vld [vmem:[%s1299] sm:$0x1]
    %v1458 = vunpack.c.l.bf16 %v1457
    %v1459 = vmul.f32 %v237, %v1456
    %v1460 = vmul.f32 %v247, %v1458
    %v1461 = vadd.f32 %v1459, %v1460
    %v1462 = vpack.c.bf16 %v1461, %v1461
    %1463 = vst [vmem:[%s623] sm:$0x1] %v1462
    %v1464 = vmul.f32 %v237, %v1458
    %v1465 = vmul.f32 %v247, %v1456
    %v1466 = vadd.f32 %v1464, %v1465
    %v1467 = vpack.c.bf16 %v1466, %v1466
    %1468 = vst [vmem:[%s1299] sm:$0x1] %v1467
    %v1469 = vld [vmem:[%s762] sm:$0x1]
    %v1470 = vunpack.c.l.bf16 %v1469
    %v1471 = vld [vmem:[%s1160] sm:$0x1]
    %v1472 = vunpack.c.l.bf16 %v1471
    %v1473 = vmul.f32 %v237, %v1470
    %v1474 = vmul.f32 %v247, %v1472
    %v1475 = vadd.f32 %v1473, %v1474
    %v1476 = vpack.c.bf16 %v1475, %v1475
    %1477 = vst [vmem:[%s762] sm:$0x1] %v1476
    %v1478 = vmul.f32 %v237, %v1472
    %v1479 = vmul.f32 %v247, %v1470
    %v1480 = vadd.f32 %v1478, %v1479
    %v1481 = vpack.c.bf16 %v1480, %v1480
    %1482 = vst [vmem:[%s1160] sm:$0x1] %v1481
    %v1483 = vld [vmem:[%s901] sm:$0x1]
    %v1484 = vunpack.c.l.bf16 %v1483
    %v1485 = vld [vmem:[%s1026] sm:$0x1]
    %v1486 = vunpack.c.l.bf16 %v1485
    %v1487 = vmul.f32 %v237, %v1484
    %v1488 = vmul.f32 %v247, %v1486
    %v1489 = vadd.f32 %v1487, %v1488
    %v1490 = vpack.c.bf16 %v1489, %v1489
    %1491 = vst [vmem:[%s901] sm:$0x1] %v1490
    %v1492 = vmul.f32 %v237, %v1486
    %v1493 = vmul.f32 %v247, %v1484
    %v1494 = vadd.f32 %v1492, %v1493
    %v1495 = vpack.c.bf16 %v1494, %v1494
    %1496 = vst [vmem:[%s1026] sm:$0x1] %v1495
    // Predicated region
    $region46: #{tpu_custom_call.1} parent=1 // pred_check
      _
    $region47: #{tpu_custom_call.1} parent=1 // pred_check_branch
      %1498 = sbr.rel (0) target = $region49
    $region48: #{tpu_custom_call.1} parent=1 // pred_region
      %1500 = vsyncadd [#allocation5], 0
      %s1501 = sshll.u32 [#allocation12], 4
      %s1502 = int_to_ptr.vmem [resolvable:$true] %s1501
      %s1503 = sshll.u32 %s6, 4
      %s1504 = int_to_ptr.hbm [resolvable:$true] %s1503
      %1509 = dma.vmem_to_hbm [thread:$0]  %s1502, 128, %s1504, [#allocation5], 16, 16, 1
    $region49: #{tpu_custom_call.1} parent=1 // pred_fallthru
      _
    // Predicated region
    $region50: #{tpu_custom_call.1} parent=1 // pred_check
      _
    $region51: #{tpu_custom_call.1} parent=1 // pred_check_branch
      %1511 = sbr.rel (0) target = $region53
    $region52: #{tpu_custom_call.1} parent=1 // pred_region
      %1513 = vsyncadd [#allocation14], 0
      %s1515 = sshll.u32 [#allocation13], 4
      %s1516 = int_to_ptr.vmem [resolvable:$true] %s1515
      %s1517 = sshll.u32 %s7, 4
      %s1518 = int_to_ptr.hbm [resolvable:$true] %s1517
      %1520 = dma.vmem_to_hbm [thread:$0]  %s1516, 32, %s1518, [#allocation14]
    $region53: #{tpu_custom_call.1} parent=1 // pred_fallthru
      _
    // Predicated region
    $region54: #{tpu_custom_call.1} parent=1 // pred_check
      _
    $region55: #{tpu_custom_call.1} parent=1 // pred_check_branch
      %1522 = sbr.rel (0) target = $region57
    $region56: #{tpu_custom_call.1} parent=1 // pred_region
      %1524 = dma.done [#allocation5], 128
    $region57: #{tpu_custom_call.1} parent=1 // pred_fallthru
      _
    // Predicated region
    $region58: #{tpu_custom_call.1} parent=1 // pred_check
      _
    $region59: #{tpu_custom_call.1} parent=1 // pred_check_branch
      %1526 = sbr.rel (0) target = $region61
    $region60: #{tpu_custom_call.1} parent=1 // pred_region
      %1528 = dma.done [#allocation14], 32
    $region61: #{tpu_custom_call.1} parent=1 // pred_fallthru
      _
    %1529 = vsyncpa [#allocation4], 1
    %1530 = vsyncpa [#allocation7], 1
    %1531 = vsyncpa [#allocation10], 1
    %1532 = vsyncpa [#allocation5], 1
    %1533 = vsyncpa [#allocation14], 1

</llo_original>
